<compile_context>
chip_gen: v7x
topology: tpu7x:2x2x1
jax: 0.10.0
libtpu: 0.0.40
codegen_flags: <defaults>
</compile_context>

<pallas_src>
import functools

import jax
import jax.numpy as jnp
from jax.experimental import pallas as pl
from jax.experimental.pallas import tpu as pltpu

_LN_EPS = 1e-5


def _layernorm_f32(x, gamma, beta):
    mu = jnp.mean(x, axis=-1, keepdims=True)
    var = jnp.mean(jnp.square(x - mu), axis=-1, keepdims=True)
    return (x - mu) * jax.lax.rsqrt(var + _LN_EPS) * gamma + beta


def _pick_tile(dim, candidates):
    for c in candidates:
        if dim >= c and dim % c == 0:
            return c
    return dim


# --------------------------------------------------------------------------- #
# Kernel 1: LN1 -> multi-head causal attention -> output proj -> residual add #
# --------------------------------------------------------------------------- #
def _attn_block_kernel(xq_ref, xkv_ref, g1_ref, b1_ref, wqkv_ref, wo_ref,
                       o_ref, k_scr, v_scr, *, num_heads, head_size):
    H = num_heads * head_size
    qi = pl.program_id(1)

    gamma = g1_ref[...]
    beta = b1_ref[...]
    wqkv = wqkv_ref[...]                                   # (H, 3H) bf16

    # K/V for the full sequence: computed once per batch element (qi == 0) and
    # cached in bf16 VMEM scratch.  The query-tile grid axis is 'arbitrary' so
    # the cache stays valid across the inner loop (and per-core on megacore).
    # TODO(synk): for very long sequences this still holds full-sequence K/V
    # and a (TQ, T) score slab; a flash-style KV-tiled online softmax would be
    # needed there.
    @pl.when(qi == 0)
    def _compute_kv():
        xf = xkv_ref[0].astype(jnp.float32)                # (T, H)
        ln = _layernorm_f32(xf, gamma, beta)
        kv = jnp.dot(ln.astype(jnp.bfloat16), wqkv[:, H:],
                     preferred_element_type=jnp.float32)   # (T, 2H)
        seq = xf.shape[0]
        k = kv[:, :H].reshape(seq, num_heads, head_size)
        v = kv[:, H:].reshape(seq, num_heads, head_size)
        k_scr[...] = k.transpose(1, 0, 2).astype(jnp.bfloat16)   # (h, T, d)
        v_scr[...] = v.transpose(1, 0, 2).astype(jnp.bfloat16)

    # Q for this query tile (scale folded into Q: T*d mults instead of T*T).
    xq = xq_ref[0].astype(jnp.float32)                     # (TQ, H)
    lnq = _layernorm_f32(xq, gamma, beta)
    q = jnp.dot(lnq.astype(jnp.bfloat16), wqkv[:, :H],
                preferred_element_type=jnp.float32)        # (TQ, H)
    q = q * (head_size ** -0.5)
    tq = xq.shape[0]
    q3 = q.reshape(tq, num_heads, head_size).transpose(1, 0, 2)  # (h, TQ, d)
    q3 = q3.astype(jnp.bfloat16)

    # Batched-head attention: no per-head lane slicing, no lane-dim concat.
    k3 = k_scr[...]
    v3 = v_scr[...]
    s = jnp.einsum('hqd,hkd->hqk', q3, k3,
                   preferred_element_type=jnp.float32)     # (h, TQ, T)
    row = jax.lax.broadcasted_iota(jnp.int32, s.shape, 1) + qi * tq
    col = jax.lax.broadcasted_iota(jnp.int32, s.shape, 2)
    s = jnp.where(row >= col, s, -1e30)

    m = jnp.max(s, axis=-1, keepdims=True)
    p = jnp.exp(s - m)
    l = jnp.sum(p, axis=-1, keepdims=True)
    o = jnp.einsum('hqk,hkd->hqd', p.astype(jnp.bfloat16), v3,
                   preferred_element_type=jnp.float32)     # (h, TQ, d)
    # Normalize the small (h, TQ, d) output instead of the (h, TQ, T) probs;
    # approx reciprocal runs on the EUP slot.
    o = o * pl.reciprocal(l, approx=True)

    heads = o.transpose(1, 0, 2).reshape(tq, H)            # (TQ, H)
    proj = jnp.dot(heads.astype(jnp.bfloat16), wo_ref[...],
                   preferred_element_type=jnp.float32)
    o_ref[0] = (xq + proj).astype(o_ref.dtype)             # residual add


def attention_block(x, g1, b1, wq, wk, wv, wo, *, num_heads, head_size,
                    tq=None):
    """x: (B, T, H) -> x + proj(MHA(LN1(x)))."""
    B, T, H = x.shape
    TQ = tq or _pick_tile(T, (256, 128))
    nq = T // TQ

    # Fused QKV weight (one MXU RHS instead of three) and bf16 weights:
    # bf16-native MXU on v5e/v6e/v7x, and half the weight DMA traffic.
    wqkv = jnp.concatenate([wq, wk, wv], axis=1).astype(jnp.bfloat16)  # (H, 3H)
    wo_bf = wo.astype(jnp.bfloat16)

    kern = functools.partial(_attn_block_kernel,
                             num_heads=num_heads, head_size=head_size)
    return pl.pallas_call(
        kern,
        out_shape=jax.ShapeDtypeStruct((B, T, H), x.dtype),
        grid_spec=pltpu.PrefetchScalarGridSpec(
            num_scalar_prefetch=0,
            grid=(B, nq),
            in_specs=[
                pl.BlockSpec((1, TQ, H), lambda b, q: (b, q, 0)),   # x query tile
                pl.BlockSpec((1, T, H), lambda b, q: (b, 0, 0)),    # x full (K/V source)
                pl.BlockSpec((1, H), lambda b, q: (0, 0)),          # ln1 gamma
                pl.BlockSpec((1, H), lambda b, q: (0, 0)),          # ln1 beta
                pl.BlockSpec((H, 3 * H), lambda b, q: (0, 0)),      # fused Wqkv (bf16)
                pl.BlockSpec((H, H), lambda b, q: (0, 0)),          # Wo (bf16)
            ],
            out_specs=pl.BlockSpec((1, TQ, H), lambda b, q: (b, q, 0)),
            scratch_shapes=[
                pltpu.VMEM((num_heads, T, head_size), jnp.bfloat16),  # K cache
                pltpu.VMEM((num_heads, T, head_size), jnp.bfloat16),  # V cache
            ],
        ),
        compiler_params=pltpu.CompilerParams(
            dimension_semantics=("parallel", "arbitrary")),
    )(x, x, g1.reshape(1, H), b1.reshape(1, H), wqkv, wo_bf)


# --------------------------------------------------------------------------- #
# Kernel 2: LN2 -> Linear(H, F) -> ReLU -> Linear(F, H) -> residual add       #
# Tiled grid: (M // TM, F // TF); M axis parallel, F axis is the reduction.   #
# --------------------------------------------------------------------------- #
def _ffn_block_kernel(x_ref, g2_ref, bln2_ref, w1_ref, b1_ref, w2_ref, b2_ref,
                      o_ref, xln_ref, acc_ref):
    f = pl.program_id(1)

    # Once per M tile (f == 0): LN2(x) into bf16 VMEM scratch, zero f32 acc.
    @pl.when(f == 0)
    def _init():
        x = x_ref[...].astype(jnp.float32)
        xln_ref[...] = _layernorm_f32(x, g2_ref[...], bln2_ref[...]).astype(
            xln_ref.dtype)
        acc_ref[...] = jnp.zeros_like(acc_ref)

    # h_slab = relu(xln @ W1[:, fTF:(f+1)TF] + b1_slab)   (bf16 MXU, f32 acc)
    h = jnp.dot(xln_ref[...], w1_ref[...], preferred_element_type=jnp.float32)
    h = jnp.maximum(h + b1_ref[...], 0.0)
    # accumulate h_slab @ W2[fTF:(f+1)TF, :]  into f32 scratch
    acc_ref[...] += jnp.dot(h.astype(w2_ref.dtype), w2_ref[...],
                            preferred_element_type=jnp.float32)

    # Finalize once per M tile: b2 + residual, one lane-dense (TM, H) store.
    @pl.when(f == pl.num_programs(1) - 1)
    def _finalize():
        o_ref[...] = (acc_ref[...] + b2_ref[...]
                      + x_ref[...].astype(jnp.float32)).astype(o_ref.dtype)


_FFN_VMEM_BUDGET = 40 * 1024 * 1024   # conservative: fits v7x 64 MiB physical


def _ffn_footprint(TM, TF, H, x_itemsize):
    w_stream = 2 * (H * TF + TF * H) * 2            # bf16 W1 + W2 slabs, double-buffered
    resident = TM * H * (2 * x_itemsize             # x tile (double-buffered)
                         + 2                        # bf16 LN2 scratch
                         + 4                        # f32 accumulator
                         + 2 * x_itemsize)          # out tile (double-buffered)
    misc = 2 * TF * 4 + 6 * H * 4
    return w_stream + resident + misc


def _pick_ffn_tiles(M, H, F, x_itemsize, budget):
    tm_cands = [c for c in (512, 256, 128) if M % c == 0] or [M]
    tf_cands = [c for c in (2048, 1024, 512, 256, 128) if F % c == 0] or [F]
    for TM in tm_cands:
        for TF in tf_cands:
            if _ffn_footprint(TM, TF, H, x_itemsize) <= budget:
                return TM, TF
    return tm_cands[-1], tf_cands[-1]


def ffn_block(x, g2, beta2, w1, b1, w2, b2, *, tm=None, tf=None):
    """x: (B, T, H) -> x + FFN(LN2(x))."""
    B, T, H = x.shape
    F = w1.shape[1]
    M = B * T
    x2d = x.reshape(M, H)

    if tm and tf:
        TM, TF = tm, tf
    else:
        TM, TF = _pick_ffn_tiles(M, H, F, x.dtype.itemsize, _FFN_VMEM_BUDGET)
    # v7x megacore: give the parallel M axis >= 2 tiles when cheap to do so.
    if M // TM < 2 and TM >= 256 and (TM // 2) % 128 == 0:
        TM //= 2
    grid = (M // TM, F // TF)

    est = _ffn_footprint(TM, TF, H, x.dtype.itemsize)
    vmem_limit = int(min(56 * 1024 * 1024, max(32 * 1024 * 1024, 2 * est)))

    # bf16 weights: MXU-native on all gens, half the HBM weight traffic.
    w1_bf = w1.astype(jnp.bfloat16)
    w2_bf = w2.astype(jnp.bfloat16)

    n_m_tiles = M // TM
    cost = pl.CostEstimate(
        flops=4 * M * H * F,
        transcendentals=0,
        bytes_accessed=int(2 * M * H * x.dtype.itemsize
                           + n_m_tiles * (w1.size + w2.size) * 2
                           + (b1.size + b2.size + g2.size + beta2.size) * 4),
    )

    out2d = pl.pallas_call(
        _ffn_block_kernel,
        out_shape=jax.ShapeDtypeStruct((M, H), x.dtype),
        grid_spec=pltpu.PrefetchScalarGridSpec(
            num_scalar_prefetch=0,
            grid=grid,
            in_specs=[
                pl.BlockSpec((TM, H), lambda i, f: (i, 0)),   # x tile (resident over f)
                pl.BlockSpec((1, H), lambda i, f: (0, 0)),    # ln2 gamma
                pl.BlockSpec((1, H), lambda i, f: (0, 0)),    # ln2 beta
                pl.BlockSpec((H, TF), lambda i, f: (0, f)),   # W1 slab (streams over f)
                pl.BlockSpec((1, TF), lambda i, f: (0, f)),   # b1 slab
                pl.BlockSpec((TF, H), lambda i, f: (f, 0)),   # W2 slab (streams over f)
                pl.BlockSpec((1, H), lambda i, f: (0, 0)),    # b2
            ],
            out_specs=pl.BlockSpec((TM, H), lambda i, f: (i, 0)),
            scratch_shapes=[
                pltpu.VMEM((TM, H), jnp.bfloat16),   # LN2(x) tile (once per M tile)
                pltpu.VMEM((TM, H), jnp.float32),    # f32 accumulator
            ],
        ),
        compiler_params=pltpu.CompilerParams(
            dimension_semantics=("parallel", "arbitrary"),
            vmem_limit_bytes=vmem_limit),
        cost_estimate=cost,
    )(x2d, g2.reshape(1, H), beta2.reshape(1, H),
      w1_bf, b1.reshape(1, F), w2_bf, b2.reshape(1, H))

    return out2d.reshape(B, T, H)


# --------------------------------------------------------------------------- #
# Full block forward + params                                                 #
# --------------------------------------------------------------------------- #
def block_forward(x, p, *, num_heads, head_size):
    attn_emb = attention_block(x, p["ln1_g"], p["ln1_b"],
                               p["wq"], p["wk"], p["wv"], p["wo"],
                               num_heads=num_heads, head_size=head_size)
    return ffn_block(attn_emb, p["ln2_g"], p["ln2_b"],
                     p["w1"], p["b1"], p["w2"], p["b2"])


def init_block_params(key, hidden, num_heads, head_size, mult,
                      dtype=jnp.float32):
    """Mirrors nn.Linear U(-1/sqrt(fan_in), 1/sqrt(fan_in)); LN gamma=1, beta=0."""
    assert num_heads * head_size == hidden
    F = mult * hidden
    ks = jax.random.split(key, 8)

    def lin(k, fan_in, shape):
        lim = 1.0 / jnp.sqrt(fan_in)
        return jax.random.uniform(k, shape, dtype, -lim, lim)

    return dict(
        wq=lin(ks[0], hidden, (hidden, hidden)),
        wk=lin(ks[1], hidden, (hidden, hidden)),
        wv=lin(ks[2], hidden, (hidden, hidden)),
        wo=lin(ks[3], hidden, (hidden, hidden)),
        w1=lin(ks[4], hidden, (hidden, F)),
        b1=lin(ks[5], hidden, (F,)),
        w2=lin(ks[6], F, (F, hidden)),
        b2=lin(ks[7], F, (hidden,)),
        ln1_g=jnp.ones((hidden,), dtype), ln1_b=jnp.zeros((hidden,), dtype),
        ln2_g=jnp.ones((hidden,), dtype), ln2_b=jnp.zeros((hidden,), dtype),
    )


# --------------------------------------------------------------------------- #
# Plain-JAX reference (f32 everywhere)                                        #
# --------------------------------------------------------------------------- #
def _layernorm_ref(x, g, b, eps=_LN_EPS):
    mu = x.mean(-1, keepdims=True)
    var = ((x - mu) ** 2).mean(-1, keepdims=True)
    return (x - mu) / jnp.sqrt(var + eps) * g + b


def block_ref(x, p, num_heads, head_size):
    B, T, H = x.shape
    xl = _layernorm_ref(x, p["ln1_g"], p["ln1_b"])
    q = (xl @ p["wq"]).reshape(B, T, num_heads, head_size).transpose(0, 2, 1, 3)
    k = (xl @ p["wk"]).reshape(B, T, num_heads, head_size).transpose(0, 2, 1, 3)
    v = (xl @ p["wv"]).reshape(B, T, num_heads, head_size).transpose(0, 2, 1, 3)
    s = (q @ k.transpose(0, 1, 3, 2)) * head_size ** -0.5
    mask = jnp.tril(jnp.ones((T, T), bool))
    s = jnp.where(mask, s, -jnp.inf)
    a = jax.nn.softmax(s, axis=-1)
    o = (a @ v).transpose(0, 2, 1, 3).reshape(B, T, H)
    attn_emb = x + o @ p["wo"]
    xl2 = _layernorm_ref(attn_emb, p["ln2_g"], p["ln2_b"])
    h = jnp.maximum(xl2 @ p["w1"] + p["b1"], 0.0)
    return attn_emb + h @ p["w2"] + p["b2"]


if __name__ == "__main__":
    key = jax.random.PRNGKey(0)
    batch, seq, hidden, heads, mult = 2, 8, 32, 4, 4
    head_size = hidden // heads

    kx, kp = jax.random.split(key)
    x = jax.random.normal(kx, (batch, seq, hidden), jnp.float32)
    params = init_block_params(kp, hidden, heads, head_size, mult)

    out = block_forward(x, params, num_heads=heads, head_size=head_size)
    out = jax.block_until_ready(out)

    ref = block_ref(x, params, heads, head_size)
    assert out.shape == (batch, seq, hidden)
    # Tolerance accounts for bf16 MXU inputs + approx softmax reciprocal.
    assert jnp.allclose(out, ref, atol=3e-2, rtol=3e-2), \
        float(jnp.max(jnp.abs(out - ref)))

    print("KERNEL_OK")
</pallas_src>

<mosaic_0001>
module attributes {stable_mosaic.version = 11 : i64} {
  func.func @_attn_block_kernel(%arg0: i32, %arg1: i32, %arg2: memref<1x8x32xf32, #tpu.memory_space<vmem>>, %arg3: memref<1x8x32xf32, #tpu.memory_space<vmem>>, %arg4: memref<1x32xf32, #tpu.memory_space<vmem>>, %arg5: memref<1x32xf32, #tpu.memory_space<vmem>>, %arg6: memref<32x96xbf16, #tpu.memory_space<vmem>>, %arg7: memref<32x32xbf16, #tpu.memory_space<vmem>>, %arg8: memref<1x8x32xf32, #tpu.memory_space<vmem>>, %arg9: memref<4x8x8xbf16, #tpu.memory_space<vmem>>, %arg10: memref<4x8x8xbf16, #tpu.memory_space<vmem>>) attributes {dimension_semantics = [#tpu.dimension_semantics<parallel>, #tpu.dimension_semantics<arbitrary>], iteration_bounds = array<i64: 2, 1>, scalar_prefetch = 0 : i64, scratch_operands = 2 : i64, tpu.core_type = #tpu.core_type<tc>, window_params = [{transform_indices = @transform_0, window_bounds = array<i64: 1, 8, 32>}, {transform_indices = @transform_1, window_bounds = array<i64: 1, 8, 32>}, {pipeline_mode = #tpu.pipeline_mode<synchronous>, transform_indices = @transform_2, window_bounds = array<i64: 1, 32>}, {pipeline_mode = #tpu.pipeline_mode<synchronous>, transform_indices = @transform_3, window_bounds = array<i64: 1, 32>}, {pipeline_mode = #tpu.pipeline_mode<synchronous>, transform_indices = @transform_4, window_bounds = array<i64: 32, 96>}, {pipeline_mode = #tpu.pipeline_mode<synchronous>, transform_indices = @transform_5, window_bounds = array<i64: 32, 32>}, {transform_indices = @transform_6, window_bounds = array<i64: 1, 8, 32>}]} {
    %c0 = arith.constant 0 : index
    %c0_0 = arith.constant 0 : index
    %0 = vector.load %arg4[%c0, %c0_0] : memref<1x32xf32, #tpu.memory_space<vmem>>, vector<1x32xf32>
    %c0_1 = arith.constant 0 : index
    %c0_2 = arith.constant 0 : index
    %1 = vector.load %arg5[%c0_1, %c0_2] : memref<1x32xf32, #tpu.memory_space<vmem>>, vector<1x32xf32>
    %c0_3 = arith.constant 0 : index
    %c0_4 = arith.constant 0 : index
    %2 = vector.load %arg6[%c0_3, %c0_4] : memref<32x96xbf16, #tpu.memory_space<vmem>>, vector<32x96xbf16>
    %c0_i32 = arith.constant 0 : i32
    %3 = arith.cmpi eq, %arg1, %c0_i32 : i32
    %4 = arith.extui %3 : i1 to i32
    %c0_i32_5 = arith.constant 0 : i32
    %5 = arith.cmpi ne, %4, %c0_i32_5 : i32
    scf.if %5 {
      %c0_32 = arith.constant 0 : index
      %c0_33 = arith.constant 0 : index
      %c0_34 = arith.constant 0 : index
      %70 = vector.load %arg3[%c0_32, %c0_33, %c0_34] : memref<1x8x32xf32, #tpu.memory_space<vmem>>, vector<1x8x32xf32>
      %71 = vector.shape_cast %70 : vector<1x8x32xf32> to vector<8x32xf32>
      %cst_35 = arith.constant dense<0.000000e+00> : vector<8xf32>
      %72 = vector.multi_reduction <add>, %71, %cst_35 [1] : vector<8x32xf32> to vector<8xf32>
      %73 = vector.shape_cast %72 : vector<8xf32> to vector<8x1xf32>
      %cst_36 = arith.constant 3.200000e+01 : f32
      %74 = vector.broadcast %cst_36 : f32 to vector<8x1xf32>
      %75 = arith.divf %73, %74 : vector<8x1xf32>
      %76 = vector.broadcast %75 : vector<8x1xf32> to vector<8x32xf32>
      %77 = arith.subf %71, %76 : vector<8x32xf32>
      %78 = arith.mulf %77, %77 : vector<8x32xf32>
      %cst_37 = arith.constant dense<0.000000e+00> : vector<8xf32>
      %79 = vector.multi_reduction <add>, %78, %cst_37 [1] : vector<8x32xf32> to vector<8xf32>
      %80 = vector.shape_cast %79 : vector<8xf32> to vector<8x1xf32>
      %cst_38 = arith.constant 3.200000e+01 : f32
      %81 = vector.broadcast %cst_38 : f32 to vector<8x1xf32>
      %82 = arith.divf %80, %81 : vector<8x1xf32>
      %83 = vector.broadcast %75 : vector<8x1xf32> to vector<8x32xf32>
      %84 = arith.subf %71, %83 : vector<8x32xf32>
      %cst_39 = arith.constant 9.99999974E-6 : f32
      %85 = vector.broadcast %cst_39 : f32 to vector<8x1xf32>
      %86 = arith.addf %82, %85 : vector<8x1xf32>
      %87 = math.rsqrt %86 : vector<8x1xf32>
      %88 = vector.broadcast %87 : vector<8x1xf32> to vector<8x32xf32>
      %89 = arith.mulf %84, %88 : vector<8x32xf32>
      %90 = vector.broadcast %0 : vector<1x32xf32> to vector<8x32xf32>
      %91 = arith.mulf %89, %90 : vector<8x32xf32>
      %92 = vector.broadcast %1 : vector<1x32xf32> to vector<8x32xf32>
      %93 = arith.addf %91, %92 : vector<8x32xf32>
      %94 = arith.truncf %93 : vector<8x32xf32> to vector<8x32xbf16>
      %95 = vector.extract_strided_slice %2 {offsets = [0, 32], sizes = [32, 64], strides = [1, 1]} : vector<32x96xbf16> to vector<32x64xbf16>
      %cst_40 = arith.constant dense<0.000000e+00> : vector<8x64xf32>
      %96 = tpu.matmul %94, %95, %cst_40 {dimension_numbers = #tpu.dot_dimension_numbers<[1], [0], [0], [1], [0, 0, 1, 1], [], []>} : vector<8x32xbf16>, vector<32x64xbf16>, vector<8x64xf32> -> vector<8x64xf32>
      %97 = vector.extract_strided_slice %96 {offsets = [0, 0], sizes = [8, 32], strides = [1, 1]} : vector<8x64xf32> to vector<8x32xf32>
      %98 = vector.shape_cast %97 : vector<8x32xf32> to vector<8x4x8xf32>
      %99 = vector.extract_strided_slice %96 {offsets = [0, 32], sizes = [8, 32], strides = [1, 1]} : vector<8x64xf32> to vector<8x32xf32>
      %100 = vector.shape_cast %99 : vector<8x32xf32> to vector<8x4x8xf32>
      %101 = tpu.transpose %98, [1, 0, 2] : vector<8x4x8xf32> -> vector<4x8x8xf32>
      %102 = arith.truncf %101 : vector<4x8x8xf32> to vector<4x8x8xbf16>
      %c0_41 = arith.constant 0 : index
      %c0_42 = arith.constant 0 : index
      %c0_43 = arith.constant 0 : index
      %103 = vector.load %arg9[%c0_41, %c0_42, %c0_43] : memref<4x8x8xbf16, #tpu.memory_space<vmem>>, vector<4x8x8xbf16>
      tpu.vector_store %arg9[%c0_41, %c0_42, %c0_43], %102 {strides = array<i32>} : memref<4x8x8xbf16, #tpu.memory_space<vmem>>, vector<4x8x8xbf16>,
      %104 = tpu.transpose %100, [1, 0, 2] : vector<8x4x8xf32> -> vector<4x8x8xf32>
      %105 = arith.truncf %104 : vector<4x8x8xf32> to vector<4x8x8xbf16>
      %c0_44 = arith.constant 0 : index
      %c0_45 = arith.constant 0 : index
      %c0_46 = arith.constant 0 : index
      %106 = vector.load %arg10[%c0_44, %c0_45, %c0_46] : memref<4x8x8xbf16, #tpu.memory_space<vmem>>, vector<4x8x8xbf16>
      tpu.vector_store %arg10[%c0_44, %c0_45, %c0_46], %105 {strides = array<i32>} : memref<4x8x8xbf16, #tpu.memory_space<vmem>>, vector<4x8x8xbf16>,
    } else {
    }
    %c0_6 = arith.constant 0 : index
    %c0_7 = arith.constant 0 : index
    %c0_8 = arith.constant 0 : index
    %6 = vector.load %arg2[%c0_6, %c0_7, %c0_8] : memref<1x8x32xf32, #tpu.memory_space<vmem>>, vector<1x8x32xf32>
    %7 = vector.shape_cast %6 : vector<1x8x32xf32> to vector<8x32xf32>
    %cst = arith.constant dense<0.000000e+00> : vector<8xf32>
    %8 = vector.multi_reduction <add>, %7, %cst [1] : vector<8x32xf32> to vector<8xf32>
    %9 = vector.shape_cast %8 : vector<8xf32> to vector<8x1xf32>
    %cst_9 = arith.constant 3.200000e+01 : f32
    %10 = vector.broadcast %cst_9 : f32 to vector<8x1xf32>
    %11 = arith.divf %9, %10 : vector<8x1xf32>
    %12 = vector.broadcast %11 : vector<8x1xf32> to vector<8x32xf32>
    %13 = arith.subf %7, %12 : vector<8x32xf32>
    %14 = arith.mulf %13, %13 : vector<8x32xf32>
    %cst_10 = arith.constant dense<0.000000e+00> : vector<8xf32>
    %15 = vector.multi_reduction <add>, %14, %cst_10 [1] : vector<8x32xf32> to vector<8xf32>
    %16 = vector.shape_cast %15 : vector<8xf32> to vector<8x1xf32>
    %cst_11 = arith.constant 3.200000e+01 : f32
    %17 = vector.broadcast %cst_11 : f32 to vector<8x1xf32>
    %18 = arith.divf %16, %17 : vector<8x1xf32>
    %19 = vector.broadcast %11 : vector<8x1xf32> to vector<8x32xf32>
    %20 = arith.subf %7, %19 : vector<8x32xf32>
    %cst_12 = arith.constant 9.99999974E-6 : f32
    %21 = vector.broadcast %cst_12 : f32 to vector<8x1xf32>
    %22 = arith.addf %18, %21 : vector<8x1xf32>
    %23 = math.rsqrt %22 : vector<8x1xf32>
    %24 = vector.broadcast %23 : vector<8x1xf32> to vector<8x32xf32>
    %25 = arith.mulf %20, %24 : vector<8x32xf32>
    %26 = vector.broadcast %0 : vector<1x32xf32> to vector<8x32xf32>
    %27 = arith.mulf %25, %26 : vector<8x32xf32>
    %28 = vector.broadcast %1 : vector<1x32xf32> to vector<8x32xf32>
    %29 = arith.addf %27, %28 : vector<8x32xf32>
    %30 = arith.truncf %29 : vector<8x32xf32> to vector<8x32xbf16>
    %31 = vector.extract_strided_slice %2 {offsets = [0, 0], sizes = [32, 32], strides = [1, 1]} : vector<32x96xbf16> to vector<32x32xbf16>
    %cst_13 = arith.constant dense<0.000000e+00> : vector<8x32xf32>
    %32 = tpu.matmul %30, %31, %cst_13 {dimension_numbers = #tpu.dot_dimension_numbers<[1], [0], [0], [1], [0, 0, 1, 1], [], []>} : vector<8x32xbf16>, vector<32x32xbf16>, vector<8x32xf32> -> vector<8x32xf32>
    %cst_14 = arith.constant 0.353553385 : f32
    %33 = vector.broadcast %cst_14 : f32 to vector<8x32xf32>
    %34 = arith.mulf %32, %33 : vector<8x32xf32>
    %35 = vector.shape_cast %34 : vector<8x32xf32> to vector<8x4x8xf32>
    %36 = tpu.transpose %35, [1, 0, 2] : vector<8x4x8xf32> -> vector<4x8x8xf32>
    %37 = arith.truncf %36 : vector<4x8x8xf32> to vector<4x8x8xbf16>
    %c0_15 = arith.constant 0 : index
    %c0_16 = arith.constant 0 : index
    %c0_17 = arith.constant 0 : index
    %38 = vector.load %arg9[%c0_15, %c0_16, %c0_17] : memref<4x8x8xbf16, #tpu.memory_space<vmem>>, vector<4x8x8xbf16>
    %c0_18 = arith.constant 0 : index
    %c0_19 = arith.constant 0 : index
    %c0_20 = arith.constant 0 : index
    %39 = vector.load %arg10[%c0_18, %c0_19, %c0_20] : memref<4x8x8xbf16, #tpu.memory_space<vmem>>, vector<4x8x8xbf16>
    "tpu.trace_start"() <{level = 10 : i32, message = "hqd,hkd->hqk"}> : () -> ()
    %cst_21 = arith.constant dense<0.000000e+00> : vector<4x8x8xf32>
    %40 = tpu.matmul %37, %38, %cst_21 {dimension_numbers = #tpu.dot_dimension_numbers<[2], [2], [1], [1], [0, 0, 0, 1, 1, 1], [0], [0]>} : vector<4x8x8xbf16>, vector<4x8x8xbf16>, vector<4x8x8xf32> -> vector<4x8x8xf32>
    "tpu.trace_stop"() : () -> ()
    %41 = tpu.iota {dimensions = array<i32: 1>} : vector<4x8x8xi32>
    %c8_i32 = arith.constant 8 : i32
    %42 = arith.muli %arg1, %c8_i32 : i32
    %43 = vector.broadcast %42 : i32 to vector<4x8x8xi32>
    %44 = arith.addi %41, %43 : vector<4x8x8xi32>
    %45 = tpu.iota {dimensions = array<i32: 2>} : vector<4x8x8xi32>
    %46 = arith.cmpi sge, %44, %45 : vector<4x8x8xi32>
    %cst_22 = arith.constant -1.000000e+30 : f32
    %47 = vector.broadcast %cst_22 : f32 to vector<4x8x8xf32>
    %48 = arith.select %46, %40, %47 : vector<4x8x8xi1>, vector<4x8x8xf32>
    %cst_23 = arith.constant dense<0xFF800000> : vector<4x8xf32>
    %49 = vector.multi_reduction <maximumf>, %48, %cst_23 [2] : vector<4x8x8xf32> to vector<4x8xf32>
    %50 = vector.shape_cast %49 : vector<4x8xf32> to vector<4x8x1xf32>
    %51 = vector.broadcast %50 : vector<4x8x1xf32> to vector<4x8x8xf32>
    %52 = arith.subf %48, %51 : vector<4x8x8xf32>
    %53 = math.exp %52 : vector<4x8x8xf32>
    %cst_24 = arith.constant dense<0.000000e+00> : vector<4x8xf32>
    %54 = vector.multi_reduction <add>, %53, %cst_24 [2] : vector<4x8x8xf32> to vector<4x8xf32>
    %55 = vector.shape_cast %54 : vector<4x8xf32> to vector<4x8x1xf32>
    %56 = arith.truncf %53 : vector<4x8x8xf32> to vector<4x8x8xbf16>
    "tpu.trace_start"() <{level = 10 : i32, message = "hqk,hkd->hqd"}> : () -> ()
    %cst_25 = arith.constant dense<0.000000e+00> : vector<4x8x8xf32>
    %57 = tpu.matmul %56, %39, %cst_25 {dimension_numbers = #tpu.dot_dimension_numbers<[2], [1], [1], [2], [0, 0, 0, 1, 1, 2], [0], [0]>} : vector<4x8x8xbf16>, vector<4x8x8xbf16>, vector<4x8x8xf32> -> vector<4x8x8xf32>
    "tpu.trace_stop"() : () -> ()
    %58 = tpu.reciprocal %55 {approx = true} : vector<4x8x1xf32> -> vector<4x8x1xf32>
    %59 = vector.broadcast %58 : vector<4x8x1xf32> to vector<4x8x8xf32>
    %60 = arith.mulf %57, %59 : vector<4x8x8xf32>
    %61 = tpu.transpose %60, [1, 0, 2] : vector<4x8x8xf32> -> vector<8x4x8xf32>
    %62 = vector.shape_cast %61 : vector<8x4x8xf32> to vector<8x32xf32>
    %63 = arith.truncf %62 : vector<8x32xf32> to vector<8x32xbf16>
    %c0_26 = arith.constant 0 : index
    %c0_27 = arith.constant 0 : index
    %64 = vector.load %arg7[%c0_26, %c0_27] : memref<32x32xbf16, #tpu.memory_space<vmem>>, vector<32x32xbf16>
    %cst_28 = arith.constant dense<0.000000e+00> : vector<8x32xf32>
    %65 = tpu.matmul %63, %64, %cst_28 {dimension_numbers = #tpu.dot_dimension_numbers<[1], [0], [0], [1], [0, 0, 1, 1], [], []>} : vector<8x32xbf16>, vector<32x32xbf16>, vector<8x32xf32> -> vector<8x32xf32>
    %66 = arith.addf %7, %65 : vector<8x32xf32>
    %c0_29 = arith.constant 0 : index
    %c0_30 = arith.constant 0 : index
    %c0_31 = arith.constant 0 : index
    %67 = vector.load %arg8[%c0_29, %c0_30, %c0_31] : memref<1x8x32xf32, #tpu.memory_space<vmem>>, vector<1x8x32xf32>
    %68 = vector.shape_cast %67 : vector<1x8x32xf32> to vector<8x32xf32>
    %69 = vector.shape_cast %66 : vector<8x32xf32> to vector<1x8x32xf32>
    tpu.vector_store %arg8[%c0_29, %c0_30, %c0_31], %69 {strides = array<i32>} : memref<1x8x32xf32, #tpu.memory_space<vmem>>, vector<1x8x32xf32>,
    return
  }
  func.func @transform_0(%arg0: i32, %arg1: i32) -> (i32, i32, i32) {
    %c0_i32 = arith.constant 0 : i32
    %c0_i32_0 = arith.constant 0 : i32
    return %arg0, %arg1, %c0_i32 : i32, i32, i32
  }
  func.func @transform_1(%arg0: i32, %arg1: i32) -> (i32, i32, i32) {
    %c0_i32 = arith.constant 0 : i32
    %c0_i32_0 = arith.constant 0 : i32
    %c0_i32_1 = arith.constant 0 : i32
    return %arg0, %c0_i32, %c0_i32_0 : i32, i32, i32
  }
  func.func @transform_2(%arg0: i32, %arg1: i32) -> (i32, i32) {
    %c0_i32 = arith.constant 0 : i32
    %c0_i32_0 = arith.constant 0 : i32
    %c0_i32_1 = arith.constant 0 : i32
    return %c0_i32, %c0_i32_0 : i32, i32
  }
  func.func @transform_3(%arg0: i32, %arg1: i32) -> (i32, i32) {
    %c0_i32 = arith.constant 0 : i32
    %c0_i32_0 = arith.constant 0 : i32
    %c0_i32_1 = arith.constant 0 : i32
    return %c0_i32, %c0_i32_0 : i32, i32
  }
  func.func @transform_4(%arg0: i32, %arg1: i32) -> (i32, i32) {
    %c0_i32 = arith.constant 0 : i32
    %c0_i32_0 = arith.constant 0 : i32
    %c0_i32_1 = arith.constant 0 : i32
    return %c0_i32, %c0_i32_0 : i32, i32
  }
  func.func @transform_5(%arg0: i32, %arg1: i32) -> (i32, i32) {
    %c0_i32 = arith.constant 0 : i32
    %c0_i32_0 = arith.constant 0 : i32
    %c0_i32_1 = arith.constant 0 : i32
    return %c0_i32, %c0_i32_0 : i32, i32
  }
  func.func @transform_6(%arg0: i32, %arg1: i32) -> (i32, i32, i32) {
    %c0_i32 = arith.constant 0 : i32
    %c0_i32_0 = arith.constant 0 : i32
    return %arg0, %arg1, %c0_i32 : i32, i32, i32
  }
}

</mosaic_0001>

<llo_original>
// kernel: tpu_custom_call.1
$region0: #{tpu_custom_call.1}
  #allocation0 [shape = 'u32[]', space=smem, size = 0x4, offset = 0x4, fixed_abs, tag = 'smem constant byte address 0x4 - core index']
  #allocation1 [shape = 'u32[144,128]{1,0:T(1,128)}', space=vmem, size = 0x12000, scoped, tag = 'internal scratch']
  #allocation2 [shape = 'bf16[4,8,8]{2,1,0:T(8,128)(2,1)}', space=vmem, size = 0x2000, scoped, tag = 'scratch operand']
  #allocation3 [shape = 'bf16[4,8,8]{2,1,0:T(8,128)(2,1)}', space=vmem, size = 0x2000, scoped, tag = 'scratch operand']
  %s0 = inlined_call_operand.hbm [shape: f32[2,8,32], index: 0, kind: input, shape index: {}]
  %s1 = inlined_call_operand.hbm [shape: f32[2,8,32], index: 1, kind: input, shape index: {}]
  %s2 = inlined_call_operand.vmem [shape: f32[1,32], index: 2, kind: input, shape index: {}]
  %s3 = inlined_call_operand.vmem [shape: f32[1,32], index: 3, kind: input, shape index: {}]
  %s4 = inlined_call_operand.hbm [shape: bf16[32,96], index: 4, kind: input, shape index: {}]
  %s5 = inlined_call_operand.vmem [shape: bf16[32,32], index: 5, kind: input, shape index: {}]
  %s6 = inlined_call_operand.hbm [shape: f32[2,8,32], index: 6, kind: output, shape index: {}]
  %s7 = sld [smem:[#allocation0]]
  $region73: #{tpu_custom_call.1} parent=0
    _
  %s9 = ssub.s32 1, %s7
  %s10 = scalar_select 0, %s9, %s7
  $region1: #{tpu_custom_call.1} parent=0
    #allocation4 [shape = 'u8[8192]{0}', space=vmem, size = 0x2000, scoped, tag = 'input window, operand 0']
    #allocation5 [shape = 's32[2]{0}', space=sflag, size = 0x8, scoped, tag = 'scoped memory for tpu_custom_call.1']
    #allocation6 [shape = 's32[2]{0}', space=sflag, size = 0x8, scoped, tag = 'scoped memory for tpu_custom_call.1']
    #allocation7 [shape = 'u8[8192]{0}', space=vmem, size = 0x2000, scoped, tag = 'input window, operand 1']
    #allocation8 [shape = 's32[2]{0}', space=sflag, size = 0x8, scoped, tag = 'scoped memory for tpu_custom_call.1']
    #allocation9 [shape = 'u8[8192]{0}', space=vmem, size = 0x2000, scoped, tag = 'input window, operand 4, single buffered']
    #allocation10 [shape = 'u8[8192]{0}', space=vmem, size = 0x2000, scoped, tag = 'output window, operand 0']
    %11 = vsyncpa [#allocation5], 0
    %s12 = scalar_lea.sflag [#allocation5], 1
    %13 = vsyncpa %s12, 0
    %14 = vsyncpa [#allocation8], 0
    %s15 = scalar_lea.sflag [#allocation8], 1
    %16 = vsyncpa %s15, 0
    %17 = vsyncpa [#allocation6], 0
    %s18 = scalar_lea.sflag [#allocation6], 1
    %19 = vsyncpa %s18, 0
    loop: start=0, step=1, limit=4
    $region2: #{tpu_custom_call.1} parent=1 // loop_pre_header
      _
    $region3: #{tpu_custom_call.1} parent=1 // loop_header
      %s21 = sphi 0, %s25
      %p22 = scmp.ge.s32.totalorder %s21, 4
      %s28 = sphi 0, %s40
      %s29 = sphi 0, %s36
      %s30 = sphi 0, %s28
      %s31 = sphi 0, %s29
      %s32 = sphi 0, %s30
      %s33 = sphi 0, %s31
      %s45 = sphi 0, %s47
      %s48 = sphi 0, %s45
      %s49 = sphi 0, %s48
      %s65 = sphi 0, %s49
      %s71 = sphi 0, %s73
      %s74 = sphi 0, %s71
      %s75 = sphi 0, %s74
      %s91 = sphi 0, %s75
      %s95 = sphi 0, %s95
      %s97 = sphi 0, %s95
      %s98 = sphi 0, %s97
      %s112 = sphi 0, %s98
      %s116 = sphi 0, %s116
      %s118 = sphi 0, %s116
      %s119 = sphi 0, %s118
      %s133 = sphi 0, %s119
      %s137 = sphi 0, %s137
      %s139 = sphi 0, %s137
      %s140 = sphi 0, %s139
      %s154 = sphi 0, %s140
      %s158 = sphi 0, %s158
      %s160 = sphi 0, %s158
      %s161 = sphi 0, %s160
      %s175 = sphi 0, %s161
      %s183 = sphi 0, %s185
      %s186 = sphi 0, %s183
      %s187 = sphi 0, %s186
      %s203 = sphi 0, %s187
    $region4: #{tpu_custom_call.1} parent=1 // loop_header_branch
      %24 = sbr.rel (%p22) target = $region8
    $region5: #{tpu_custom_call.1} parent=1 // loop_body
      %s26 = ssub.s32 %s21, 1
      %s27 = ssub.s32 %s21, 2
      %s34 = sadd.s32 1, %s29
      %p35 = scmp.ge.s32.totalorder %s34, 1
      %s36 = scalar_select %p35, 0, %s34
      %s37 = sadd.s32 1, %s28
      %s38 = scalar_select %p35, %s37, %s28
      %p39 = scmp.ge.s32.totalorder %s38, 2
      %s40 = scalar_select %p39, 0, %s38
      %s41 = ssub.s32 %s28, %s40
      %s42 = ssub.s32 %s29, %s36
      %s43 = sor.u32 %s41, %s42
      %p44 = scmp.eq.s32.totalorder %s43, 0
      %s46 = sadd.s32 %s45, 1
      %s47 = scalar_select %p44, %s45, %s46
      %p50 = pneg %p44
      %p51 = scmp.eq.s32.totalorder %s21, 1
      %p52 = por %p50, %p51
      %p53 = scmp.ne.s32.totalorder %s45, %s48
      %p54 = scmp.eq.s32.totalorder %s21, 0
      %p55 = por %p53, %p54
      %p56 = scmp.ne.s32.totalorder %s45, %s48
      %p57 = scmp.eq.s32.totalorder %s26, 1
      %p58 = por %p56, %p57
      %p59 = scmp.ne.s32.totalorder %s48, %s49
      %p60 = scmp.eq.s32.totalorder %s26, 0
      %p61 = por %p59, %p60
      %p62 = scmp.ne.s32.totalorder %s48, %s49
      %p63 = scmp.eq.s32.totalorder %s27, 1
      %p64 = por %p62, %p63
      %p66 = scmp.ne.s32.totalorder %s49, %s65
      %p67 = scmp.eq.s32.totalorder %s27, 0
      %p68 = por %p66, %p67
      %s69 = ssub.s32 %s28, %s40
      %p70 = scmp.eq.s32.totalorder %s69, 0
      %s72 = sadd.s32 %s71, 1
      %s73 = scalar_select %p70, %s71, %s72
      %p76 = pneg %p70
      %p77 = scmp.eq.s32.totalorder %s21, 1
      %p78 = por %p76, %p77
      %p79 = scmp.ne.s32.totalorder %s71, %s74
      %p80 = scmp.eq.s32.totalorder %s21, 0
      %p81 = por %p79, %p80
      %p82 = scmp.ne.s32.totalorder %s71, %s74
      %p83 = scmp.eq.s32.totalorder %s26, 1
      %p84 = por %p82, %p83
      %p85 = scmp.ne.s32.totalorder %s74, %s75
      %p86 = scmp.eq.s32.totalorder %s26, 0
      %p87 = por %p85, %p86
      %p88 = scmp.ne.s32.totalorder %s74, %s75
      %p89 = scmp.eq.s32.totalorder %s27, 1
      %p90 = por %p88, %p89
      %p92 = scmp.ne.s32.totalorder %s75, %s91
      %p93 = scmp.eq.s32.totalorder %s27, 0
      %p94 = por %p92, %p93
      %s96 = sadd.s32 %s95, 1
      %p99 = scmp.eq.s32.totalorder %s21, 1
      %p100 = scmp.ne.s32.totalorder %s95, %s97
      %p101 = scmp.eq.s32.totalorder %s21, 0
      %p102 = por %p100, %p101
      %p103 = scmp.ne.s32.totalorder %s95, %s97
      %p104 = scmp.eq.s32.totalorder %s26, 1
      %p105 = por %p103, %p104
      %p106 = scmp.ne.s32.totalorder %s97, %s98
      %p107 = scmp.eq.s32.totalorder %s26, 0
      %p108 = por %p106, %p107
      %p109 = scmp.ne.s32.totalorder %s97, %s98
      %p110 = scmp.eq.s32.totalorder %s27, 1
      %p111 = por %p109, %p110
      %p113 = scmp.ne.s32.totalorder %s98, %s112
      %p114 = scmp.eq.s32.totalorder %s27, 0
      %p115 = por %p113, %p114
      %s117 = sadd.s32 %s116, 1
      %p120 = scmp.eq.s32.totalorder %s21, 1
      %p121 = scmp.ne.s32.totalorder %s116, %s118
      %p122 = scmp.eq.s32.totalorder %s21, 0
      %p123 = por %p121, %p122
      %p124 = scmp.ne.s32.totalorder %s116, %s118
      %p125 = scmp.eq.s32.totalorder %s26, 1
      %p126 = por %p124, %p125
      %p127 = scmp.ne.s32.totalorder %s118, %s119
      %p128 = scmp.eq.s32.totalorder %s26, 0
      %p129 = por %p127, %p128
      %p130 = scmp.ne.s32.totalorder %s118, %s119
      %p131 = scmp.eq.s32.totalorder %s27, 1
      %p132 = por %p130, %p131
      %p134 = scmp.ne.s32.totalorder %s119, %s133
      %p135 = scmp.eq.s32.totalorder %s27, 0
      %p136 = por %p134, %p135
      %s138 = sadd.s32 %s137, 1
      %p141 = scmp.eq.s32.totalorder %s21, 1
      %p142 = scmp.ne.s32.totalorder %s137, %s139
      %p143 = scmp.eq.s32.totalorder %s21, 0
      %p144 = por %p142, %p143
      %p145 = scmp.ne.s32.totalorder %s137, %s139
      %p146 = scmp.eq.s32.totalorder %s26, 1
      %p147 = por %p145, %p146
      %p148 = scmp.ne.s32.totalorder %s139, %s140
      %p149 = scmp.eq.s32.totalorder %s26, 0
      %p150 = por %p148, %p149
      %p151 = scmp.ne.s32.totalorder %s139, %s140
      %p152 = scmp.eq.s32.totalorder %s27, 1
      %p153 = por %p151, %p152
      %p155 = scmp.ne.s32.totalorder %s140, %s154
      %p156 = scmp.eq.s32.totalorder %s27, 0
      %p157 = por %p155, %p156
      %s159 = sadd.s32 %s158, 1
      %p162 = scmp.eq.s32.totalorder %s21, 1
      %p163 = scmp.ne.s32.totalorder %s158, %s160
      %p164 = scmp.eq.s32.totalorder %s21, 0
      %p165 = por %p163, %p164
      %p166 = scmp.ne.s32.totalorder %s158, %s160
      %p167 = scmp.eq.s32.totalorder %s26, 1
      %p168 = por %p166, %p167
      %p169 = scmp.ne.s32.totalorder %s160, %s161
      %p170 = scmp.eq.s32.totalorder %s26, 0
      %p171 = por %p169, %p170
      %p172 = scmp.ne.s32.totalorder %s160, %s161
      %p173 = scmp.eq.s32.totalorder %s27, 1
      %p174 = por %p172, %p173
      %p176 = scmp.ne.s32.totalorder %s161, %s175
      %p177 = scmp.eq.s32.totalorder %s27, 0
      %p178 = por %p176, %p177
      %s179 = ssub.s32 %s28, %s40
      %s180 = ssub.s32 %s29, %s36
      %s181 = sor.u32 %s179, %s180
      %p182 = scmp.eq.s32.totalorder %s181, 0
      %s184 = sadd.s32 %s183, 1
      %s185 = scalar_select %p182, %s183, %s184
      %p188 = pneg %p182
      %p189 = scmp.eq.s32.totalorder %s21, 1
      %p190 = por %p188, %p189
      %p191 = scmp.ne.s32.totalorder %s183, %s186
      %p192 = scmp.eq.s32.totalorder %s21, 0
      %p193 = por %p191, %p192
      %p194 = scmp.ne.s32.totalorder %s183, %s186
      %p195 = scmp.eq.s32.totalorder %s26, 1
      %p196 = por %p194, %p195
      %p197 = scmp.ne.s32.totalorder %s186, %s187
      %p198 = scmp.eq.s32.totalorder %s26, 0
      %p199 = por %p197, %p198
      %p200 = scmp.ne.s32.totalorder %s186, %s187
      %p201 = scmp.eq.s32.totalorder %s27, 1
      %p202 = por %p200, %p201
      %p204 = scmp.ne.s32.totalorder %s187, %s203
      %p205 = scmp.eq.s32.totalorder %s27, 0
      %p206 = por %p204, %p205
      %p207 = scmp.le.s32.totalorder 1, %s21
      %p208 = scmp.lt.s32.totalorder %s21, 3
      %p209 = pnand %p207, %p208
      %p210 = pneg %p209
      // Predicated region
      $region9: #{tpu_custom_call.1} parent=5 // pred_check
        _
      $region10: #{tpu_custom_call.1} parent=5 // pred_check_branch
        %212 = sbr.rel (%p209) target = $region12
      $region11: #{tpu_custom_call.1} parent=5 // pred_region
        %s213 = ssub.s32 %s21, 1
        // Predicated region
        $region13: #{tpu_custom_call.1} parent=11 // pred_check
          %p214 = pneg %p108
        $region14: #{tpu_custom_call.1} parent=11 // pred_check_branch
          %216 = sbr.rel (%p214) target = $region16
        $region15: #{tpu_custom_call.1} parent=11 // pred_region
          _
        $region16: #{tpu_custom_call.1} parent=11 // pred_fallthru
          _
        // Predicated region
        $region17: #{tpu_custom_call.1} parent=11 // pred_check
          %p217 = pneg %p129
        $region18: #{tpu_custom_call.1} parent=11 // pred_check_branch
          %219 = sbr.rel (%p217) target = $region20
        $region19: #{tpu_custom_call.1} parent=11 // pred_region
          _
        $region20: #{tpu_custom_call.1} parent=11 // pred_fallthru
          _
        // Predicated region
        $region21: #{tpu_custom_call.1} parent=11 // pred_check
          %p220 = pneg %p150
        $region22: #{tpu_custom_call.1} parent=11 // pred_check_branch
          %222 = sbr.rel (%p220) target = $region24
        $region23: #{tpu_custom_call.1} parent=11 // pred_region
          %s224 = ssub.s32 256, 256
          %225 = vsyncadd [#allocation8], %s224
          %s226 = sshll.u32 [#allocation9], 4
          %s227 = int_to_ptr.vmem [resolvable:$true] %s226
          %232 = dma.hbm_to_vmem [thread:$0]  %s4, 256, %s227, [#allocation8], 64, 64, 4
        $region24: #{tpu_custom_call.1} parent=11 // pred_fallthru
          _
        // Predicated region
        $region25: #{tpu_custom_call.1} parent=11 // pred_check
          %p233 = pneg %p171
        $region26: #{tpu_custom_call.1} parent=11 // pred_check_branch
          %235 = sbr.rel (%p233) target = $region28
        $region27: #{tpu_custom_call.1} parent=11 // pred_region
          _
        $region28: #{tpu_custom_call.1} parent=11 // pred_fallthru
          _
      $region12: #{tpu_custom_call.1} parent=5 // pred_fallthru
        _
      %p236 = scmp.lt.s32.totalorder %s21, 2
      // Predicated region
      $region29: #{tpu_custom_call.1} parent=5 // pred_check
        %p237 = pneg %p236
      $region30: #{tpu_custom_call.1} parent=5 // pred_check_branch
        %239 = sbr.rel (%p237) target = $region32
      $region31: #{tpu_custom_call.1} parent=5 // pred_region
        // Predicated region
        $region33: #{tpu_custom_call.1} parent=31 // pred_check
          %p240 = pneg %p55
        $region34: #{tpu_custom_call.1} parent=31 // pred_check_branch
          %242 = sbr.rel (%p240) target = $region36
        $region35: #{tpu_custom_call.1} parent=31 // pred_region
          %s243 = sand.u32 %s45, 1
          %s244 = scalar_lea.sflag [#allocation5], %s243
          %s245 = sand.u32 %s45, 1
          %s246 = smul.addr %s245, 8
          %s247 = scalar_lea.vmem [#allocation4], %s246
          %s249 = ssub.s32 128, 128
          %250 = vsyncadd %s244, %s249
          %s251 = sadd.s32 %s29, %s28
          %s252 = smul.addr %s251, 128
          %s253 = scalar_lea.hbm %s0, %s252
          %s255 = sshll.u32 %s247, 4
          %s256 = int_to_ptr.vmem [resolvable:$true] %s255
          %258 = dma.hbm_to_vmem [thread:$0]  %s253, 128, %s256, %s244
        $region36: #{tpu_custom_call.1} parent=31 // pred_fallthru
          _
        // Predicated region
        $region37: #{tpu_custom_call.1} parent=31 // pred_check
          %p259 = pneg %p81
        $region38: #{tpu_custom_call.1} parent=31 // pred_check_branch
          %261 = sbr.rel (%p259) target = $region40
        $region39: #{tpu_custom_call.1} parent=31 // pred_region
          %s262 = sand.u32 %s21, 1
          %s263 = scalar_lea.sflag [#allocation8], %s262
          %s264 = sand.u32 %s71, 1
          %s265 = smul.addr %s264, 8
          %s266 = scalar_lea.vmem [#allocation7], %s265
          %s268 = ssub.s32 128, 128
          %269 = vsyncadd %s263, %s268
          %s270 = smul.addr %s28, 128
          %s271 = scalar_lea.hbm %s1, %s270
          %s273 = sshll.u32 %s266, 4
          %s274 = int_to_ptr.vmem [resolvable:$true] %s273
          %276 = dma.hbm_to_vmem [thread:$0]  %s271, 128, %s274, %s263
        $region40: #{tpu_custom_call.1} parent=31 // pred_fallthru
          _
      $region32: #{tpu_custom_call.1} parent=5 // pred_fallthru
        _
      %p277 = scmp.le.s32.totalorder 1, %s21
      %p278 = scmp.lt.s32.totalorder %s21, 3
      %p279 = pnand %p277, %p278
      %p280 = pneg %p279
      // Predicated region
      $region41: #{tpu_custom_call.1} parent=5 // pred_check
        _
      $region42: #{tpu_custom_call.1} parent=5 // pred_check_branch
        %282 = sbr.rel (%p279) target = $region44
      $region43: #{tpu_custom_call.1} parent=5 // pred_region
        %s283 = ssub.s32 %s21, 1
        %s284 = sand.u32 %s48, 1
        %s285 = scalar_lea.sflag [#allocation5], %s284
        %s286 = sand.u32 %s48, 1
        %s287 = smul.addr %s286, 8
        %s288 = scalar_lea.vmem [#allocation4], %s287
        // Predicated region
        $region45: #{tpu_custom_call.1} parent=43 // pred_check
          %p289 = pneg %p61
        $region46: #{tpu_custom_call.1} parent=43 // pred_check_branch
          %291 = sbr.rel (%p289) target = $region48
        $region47: #{tpu_custom_call.1} parent=43 // pred_region
          %292 = dma.done %s285, 128
        $region48: #{tpu_custom_call.1} parent=43 // pred_fallthru
          _
        %s293 = sand.u32 %s26, 1
        %s294 = scalar_lea.sflag [#allocation8], %s293
        %s295 = sand.u32 %s74, 1
        %s296 = smul.addr %s295, 8
        %s297 = scalar_lea.vmem [#allocation7], %s296
        // Predicated region
        $region49: #{tpu_custom_call.1} parent=43 // pred_check
          %p298 = pneg %p87
        $region50: #{tpu_custom_call.1} parent=43 // pred_check_branch
          %300 = sbr.rel (%p298) target = $region52
        $region51: #{tpu_custom_call.1} parent=43 // pred_region
          %301 = dma.done %s294, 128
        $region52: #{tpu_custom_call.1} parent=43 // pred_fallthru
          _
        // Predicated region
        $region53: #{tpu_custom_call.1} parent=43 // pred_check
          %p302 = pneg %p150
        $region54: #{tpu_custom_call.1} parent=43 // pred_check_branch
          %304 = sbr.rel (%p302) target = $region56
        $region55: #{tpu_custom_call.1} parent=43 // pred_region
          %305 = dma.done [#allocation8], 256
        $region56: #{tpu_custom_call.1} parent=43 // pred_fallthru
          _
        %s306 = sand.u32 %s48, 1
        %s307 = scalar_lea.sflag [#allocation5], %s306
        %s308 = sand.u32 %s48, 1
        %s309 = smul.addr %s308, 8
        %s310 = scalar_lea.vmem [#allocation4], %s309
        %p311 = pneg %p61
        %p312 = pneg %p58
        %s313 = sand.u32 %s26, 1
        %s314 = scalar_lea.sflag [#allocation8], %s313
        %s315 = sand.u32 %s74, 1
        %s316 = smul.addr %s315, 8
        %s317 = scalar_lea.vmem [#allocation7], %s316
        %p318 = pneg %p87
        %p319 = pneg %p84
        %p320 = pneg %p108
        %p321 = pneg %p105
        %p322 = pneg %p129
        %p323 = pneg %p126
        %p324 = pneg %p150
        %p325 = pneg %p147
        %p326 = pneg %p171
        %p327 = pneg %p168
        %p328 = pneg %p199
        %p329 = pneg %p196
        %s330 = sand.u32 %s186, 1
        %s331 = scalar_lea.sflag [#allocation6], %s330
        %s332 = sand.u32 %s186, 1
        %s333 = smul.addr %s332, 8
        %s334 = scalar_lea.vmem [#allocation10], %s333
        %v336 = vld [vmem:[%s2] sm:$0x1]
        %v337 = vld [vmem:[%s3] sm:$0x1]
        %v338 = vld [vmem:[#allocation9] sm:$0xf]
        %v339 = vld [vmem:[#allocation9 + $0x4] sm:$0xf]
        %v340 = vld [vmem:[#allocation9 + $0x8] sm:$0xf]
        %v341 = vld [vmem:[#allocation9 + $0xc] sm:$0xf]
        %p342 = scmp.eq.s32.totalorder %s31, 0
        // Predicated region
        $region57: #{tpu_custom_call.1} parent=43 // pred_check
          %p343 = pneg %p342
        $region58: #{tpu_custom_call.1} parent=43 // pred_check_branch
          %345 = sbr.rel (%p343) target = $region60
        $region59: #{tpu_custom_call.1} parent=43 // pred_region
          %v346 = vld [vmem:[%s297] sm:$0xff]
          %vm347 = vcmask 261120
          %v348 = vsel %vm347, %v346, 0.0
          %349 = vadd.xlane.f32.xlu0 %v348
          %v350 = vpop.xlane.xlu0 %349
          %v351 = vrcp.pop 32.0
          %v352 = vmul.f32 %v350, %v351
          %v353 = vsub.f32 %v346, %v352
          %v354 = vmul.f32 %v353, %v353
          %v355 = vsel %vm347, %v354, 0.0
          %356 = vadd.xlane.f32.xlu0 %v355
          %v357 = vpop.xlane.xlu0 %356
          %v358 = vmul.f32 %v357, %v351
          %v359 = vadd.f32 %v358, 1e-05
          %v360 = vrsqrt.pop %v359
          %v361 = vmul.f32 %v353, %v360
          %v363 = vlaneseq
          %v364 = vshrl.u32 %v363, 7
          %v365 = vsub.s32 0, %v364
          %v366 = vrot.slane %v336, %v365
          %v368 = vmul.f32 %v361, %v366
          %v370 = vlaneseq
          %v371 = vshrl.u32 %v370, 7
          %v372 = vsub.s32 0, %v371
          %v373 = vrot.slane %v337, %v372
          %v375 = vadd.f32 %v368, %v373
          %v376 = vpack.c.bf16 %v375, %v375
          %v381 = vunpack.c.l.b16 %v338
          %v382 = vunpack.c.l.b16 %v339
          %v383 = vunpack.c.l.b16 %v340
          %v384 = vunpack.c.l.b16 %v341
          %v385 = vpack.c.b16 %v382, %v381
          %v386 = vpack.c.b16 %v384, %v383
          %387 = vrot.lane.b32.xlu0 %v385, 96
          %v388 = vpop.permute.xlu0 %387
          %389 = vrot.lane.b32.xlu0 %v386, 96
          %v390 = vpop.permute.xlu0 %389
          %v394 = vsel %vm347, %v376, 0
          %396 = vmatprep.subr.bf16.mxu0 0
          %397 = vmatpush1.bf16.msra.mxu0 %v388
          %398 = vmatprep.subr.bf16.mxu0 0
          %399 = vmatpush1.bf16.msra.mxu0 %v390
          %400 = vmatprep.subr.bf16.mxu0 0
          %401 = vmatpush1.bf16.msra.mxu0 0
          %402 = vmatprep.subr.bf16.mxu0 0
          %403 = vmatpush1.bf16.msra.mxu0 0
          %404 = vmatprep.subr.bf16.mxu0 0
          %405 = vmatpush1.bf16.msra.mxu0 0
          %406 = vmatprep.subr.bf16.mxu0 0
          %407 = vmatpush1.bf16.msra.mxu0 0
          %408 = vmatprep.subr.bf16.mxu0 0
          %409 = vmatpush1.bf16.msra.mxu0 0
          %410 = vmatprep.subr.bf16.mxu0 0
          %411 = vmatpush1.bf16.msra.mxu0 0
          %412 = vmatprep.subr.bf16.mxu0 0
          %413 = vmatpush1.bf16.msra.mxu0 0
          %414 = vmatprep.subr.bf16.mxu0 0
          %415 = vmatpush1.bf16.msra.mxu0 0
          %416 = vmatprep.subr.bf16.mxu0 0
          %417 = vmatpush1.bf16.msra.mxu0 0
          %418 = vmatprep.subr.bf16.mxu0 0
          %419 = vmatpush1.bf16.msra.mxu0 0
          %420 = vmatprep.subr.bf16.mxu0 0
          %421 = vmatpush1.bf16.msra.mxu0 0
          %422 = vmatprep.subr.bf16.mxu0 0
          %423 = vmatpush1.bf16.msra.mxu0 0
          %424 = vmatprep.subr.bf16.mxu0 0
          %425 = vmatpush1.bf16.msra.mxu0 0
          %426 = vmatprep.subr.bf16.mxu0 0
          %427 = vmatpush1.bf16.msra.mxu0 0
          %428 = vmatprep.mubr.bf16.mxu0 0
          %429 = vmatmul.mubr.bf16.gmra.mrb[0].mxu0 %v394
          %v430 = vpop.f32.mrb[0].mxu0
          %v431 = vadd.f32 0.0, %v430
          %v432 = vpop.f32.mrb[0].mxu0
          %v433 = vpop.f32.mrb[0].mxu0
          %v434 = vpop.f32.mrb[0].mxu0
          %435 = vdwg.mxu0
          %437 = vrot.lane.b32.xlu0 %v431, 120
          %v438 = vpop.permute.xlu0 %437
          %440 = vrot.lane.b32.xlu0 %v431, 112
          %v441 = vpop.permute.xlu0 %440
          %443 = vrot.lane.b32.xlu0 %v431, 104
          %v444 = vpop.permute.xlu0 %443
          %v446 = vcombine.low %v431, %v441
          %v447 = vcombine.high %v431, %v441
          %v449 = vunpack.c.l.s4 1983009808
          %v450 = vunpack.c.0.s8 %v449
          %v451 = vlaneseq
          %v452 = vshrl.u32 %v451, 7
          %v453 = vsub.s32 %v450, %v452
          %v454 = vrot.slane %v446, %v453
          %v456 = vunpack.c.l.s4 1983009808
          %v457 = vunpack.c.0.s8 %v456
          %v458 = vlaneseq
          %v459 = vshrl.u32 %v458, 7
          %v460 = vsub.s32 %v457, %v459
          %v461 = vrot.slane %v447, %v460
          %v462 = vcombine.low %v438, %v444
          %v463 = vcombine.high %v438, %v444
          %v465 = vunpack.c.l.s4 1983009808
          %v466 = vunpack.c.0.s8 %v465
          %v467 = vlaneseq
          %v468 = vshrl.u32 %v467, 7
          %v469 = vsub.s32 %v466, %v468
          %v470 = vrot.slane %v462, %v469
          %v472 = vunpack.c.l.s4 1983009808
          %v473 = vunpack.c.0.s8 %v472
          %v474 = vlaneseq
          %v475 = vshrl.u32 %v474, 7
          %v476 = vsub.s32 %v473, %v475
          %v477 = vrot.slane %v463, %v476
          %v478 = vcombine.low %v454, %v470
          %v479 = vcombine.high %v454, %v470
          %v481 = vunpack.c.l.s4 1934713408
          %v482 = vunpack.c.0.s8 %v481
          %v483 = vlaneseq
          %v484 = vshrl.u32 %v483, 7
          %v485 = vsub.s32 %v482, %v484
          %v486 = vrot.slane %v478, %v485
          %v488 = vunpack.c.l.s4 1934713408
          %v489 = vunpack.c.0.s8 %v488
          %v490 = vlaneseq
          %v491 = vshrl.u32 %v490, 7
          %v492 = vsub.s32 %v489, %v491
          %v493 = vrot.slane %v479, %v492
          %v494 = vcombine.low %v461, %v477
          %v495 = vcombine.high %v461, %v477
          %v497 = vunpack.c.l.s4 1934713408
          %v498 = vunpack.c.0.s8 %v497
          %v499 = vlaneseq
          %v500 = vshrl.u32 %v499, 7
          %v501 = vsub.s32 %v498, %v500
          %v502 = vrot.slane %v494, %v501
          %v504 = vunpack.c.l.s4 1934713408
          %v505 = vunpack.c.0.s8 %v504
          %v506 = vlaneseq
          %v507 = vshrl.u32 %v506, 7
          %v508 = vsub.s32 %v505, %v507
          %v509 = vrot.slane %v495, %v508
          %v510 = vcombine.high %v486, 0.0
          %v511 = vcombine.high %v493, 0.0
          %v512 = vcombine.high %v502, 0.0
          %v513 = vcombine.high %v509, 0.0
          %514 = vrot.lane.b32.xlu0 %v431, 96
          %v515 = vpop.permute.xlu0 %514
          %516 = vrot.lane.b32.xlu0 %v438, 96
          %v517 = vpop.permute.xlu0 %516
          %518 = vrot.lane.b32.xlu0 %v441, 96
          %v519 = vpop.permute.xlu0 %518
          %520 = vrot.lane.b32.xlu0 %v444, 96
          %v521 = vpop.permute.xlu0 %520
          %v526 = vcombine.low %v515, %v519
          %v527 = vcombine.high %v515, %v519
          %v529 = vunpack.c.l.s4 1983009808
          %v530 = vunpack.c.0.s8 %v529
          %v531 = vlaneseq
          %v532 = vshrl.u32 %v531, 7
          %v533 = vsub.s32 %v530, %v532
          %v534 = vrot.slane %v526, %v533
          %v536 = vunpack.c.l.s4 1983009808
          %v537 = vunpack.c.0.s8 %v536
          %v538 = vlaneseq
          %v539 = vshrl.u32 %v538, 7
          %v540 = vsub.s32 %v537, %v539
          %v541 = vrot.slane %v527, %v540
          %v542 = vcombine.low %v517, %v521
          %v543 = vcombine.high %v517, %v521
          %v545 = vunpack.c.l.s4 1983009808
          %v546 = vunpack.c.0.s8 %v545
          %v547 = vlaneseq
          %v548 = vshrl.u32 %v547, 7
          %v549 = vsub.s32 %v546, %v548
          %v550 = vrot.slane %v542, %v549
          %v552 = vunpack.c.l.s4 1983009808
          %v553 = vunpack.c.0.s8 %v552
          %v554 = vlaneseq
          %v555 = vshrl.u32 %v554, 7
          %v556 = vsub.s32 %v553, %v555
          %v557 = vrot.slane %v543, %v556
          %v558 = vcombine.low %v534, %v550
          %v559 = vcombine.high %v534, %v550
          %v561 = vunpack.c.l.s4 1934713408
          %v562 = vunpack.c.0.s8 %v561
          %v563 = vlaneseq
          %v564 = vshrl.u32 %v563, 7
          %v565 = vsub.s32 %v562, %v564
          %v566 = vrot.slane %v558, %v565
          %v568 = vunpack.c.l.s4 1934713408
          %v569 = vunpack.c.0.s8 %v568
          %v570 = vlaneseq
          %v571 = vshrl.u32 %v570, 7
          %v572 = vsub.s32 %v569, %v571
          %v573 = vrot.slane %v559, %v572
          %v574 = vcombine.low %v541, %v557
          %v575 = vcombine.high %v541, %v557
          %v577 = vunpack.c.l.s4 1934713408
          %v578 = vunpack.c.0.s8 %v577
          %v579 = vlaneseq
          %v580 = vshrl.u32 %v579, 7
          %v581 = vsub.s32 %v578, %v580
          %v582 = vrot.slane %v574, %v581
          %v584 = vunpack.c.l.s4 1934713408
          %v585 = vunpack.c.0.s8 %v584
          %v586 = vlaneseq
          %v587 = vshrl.u32 %v586, 7
          %v588 = vsub.s32 %v585, %v587
          %v589 = vrot.slane %v575, %v588
          %v590 = vcombine.high %v566, 0.0
          %v591 = vcombine.high %v573, 0.0
          %v592 = vcombine.high %v582, 0.0
          %v593 = vcombine.high %v589, 0.0
          %v594 = vcombine.low %v486, %v493
          %v596 = vunpack.c.l.s4 1983009808
          %v597 = vunpack.c.0.s8 %v596
          %v598 = vlaneseq
          %v599 = vshrl.u32 %v598, 7
          %v600 = vsub.s32 %v597, %v599
          %v601 = vrot.slane %v594, %v600
          %v602 = vcombine.low %v510, %v511
          %v604 = vunpack.c.l.s4 1983009808
          %v605 = vunpack.c.0.s8 %v604
          %v606 = vlaneseq
          %v607 = vshrl.u32 %v606, 7
          %v608 = vsub.s32 %v605, %v607
          %v609 = vrot.slane %v602, %v608
          %v610 = vcombine.low %v502, %v509
          %v612 = vunpack.c.l.s4 1983009808
          %v613 = vunpack.c.0.s8 %v612
          %v614 = vlaneseq
          %v615 = vshrl.u32 %v614, 7
          %v616 = vsub.s32 %v613, %v615
          %v617 = vrot.slane %v610, %v616
          %v618 = vcombine.low %v512, %v513
          %v620 = vunpack.c.l.s4 1983009808
          %v621 = vunpack.c.0.s8 %v620
          %v622 = vlaneseq
          %v623 = vshrl.u32 %v622, 7
          %v624 = vsub.s32 %v621, %v623
          %v625 = vrot.slane %v618, %v624
          %v626 = vcombine.low %v601, %v609
          %v627 = vcombine.high %v601, %v609
          %v629 = vunpack.c.l.s4 1934713408
          %v630 = vunpack.c.0.s8 %v629
          %v631 = vlaneseq
          %v632 = vshrl.u32 %v631, 7
          %v633 = vsub.s32 %v630, %v632
          %v634 = vrot.slane %v626, %v633
          %v636 = vunpack.c.l.s4 1934713408
          %v637 = vunpack.c.0.s8 %v636
          %v638 = vlaneseq
          %v639 = vshrl.u32 %v638, 7
          %v640 = vsub.s32 %v637, %v639
          %v641 = vrot.slane %v627, %v640
          %v642 = vcombine.low %v617, %v625
          %v643 = vcombine.high %v617, %v625
          %v645 = vunpack.c.l.s4 1934713408
          %v646 = vunpack.c.0.s8 %v645
          %v647 = vlaneseq
          %v648 = vshrl.u32 %v647, 7
          %v649 = vsub.s32 %v646, %v648
          %v650 = vrot.slane %v642, %v649
          %v652 = vunpack.c.l.s4 1934713408
          %v653 = vunpack.c.0.s8 %v652
          %v654 = vlaneseq
          %v655 = vshrl.u32 %v654, 7
          %v656 = vsub.s32 %v653, %v655
          %v657 = vrot.slane %v643, %v656
          %v658 = vcombine.low %v634, %v650
          %v659 = vcombine.high %v634, %v650
          %v660 = vcombine.low %v641, %v657
          %v661 = vcombine.high %v641, %v657
          %v662 = vpack.c.bf16 %v658, %v658
          %v663 = vpack.c.bf16 %v659, %v659
          %v664 = vpack.c.bf16 %v660, %v660
          %v665 = vpack.c.bf16 %v661, %v661
          %vm666 = vcmask 60416
          %667 = vst.msk [vmem:[#allocation2] sm:$0xf] %vm666, %v662
          %668 = vst.msk [vmem:[#allocation2 + $0x4] sm:$0xf] %vm666, %v663
          %669 = vst.msk [vmem:[#allocation2 + $0x8] sm:$0xf] %vm666, %v664
          %670 = vst.msk [vmem:[#allocation2 + $0xc] sm:$0xf] %vm666, %v665
          %v671 = vcombine.low %v566, %v573
          %v673 = vunpack.c.l.s4 1983009808
          %v674 = vunpack.c.0.s8 %v673
          %v675 = vlaneseq
          %v676 = vshrl.u32 %v675, 7
          %v677 = vsub.s32 %v674, %v676
          %v678 = vrot.slane %v671, %v677
          %v679 = vcombine.low %v590, %v591
          %v681 = vunpack.c.l.s4 1983009808
          %v682 = vunpack.c.0.s8 %v681
          %v683 = vlaneseq
          %v684 = vshrl.u32 %v683, 7
          %v685 = vsub.s32 %v682, %v684
          %v686 = vrot.slane %v679, %v685
          %v687 = vcombine.low %v582, %v589
          %v689 = vunpack.c.l.s4 1983009808
          %v690 = vunpack.c.0.s8 %v689
          %v691 = vlaneseq
          %v692 = vshrl.u32 %v691, 7
          %v693 = vsub.s32 %v690, %v692
          %v694 = vrot.slane %v687, %v693
          %v695 = vcombine.low %v592, %v593
          %v697 = vunpack.c.l.s4 1983009808
          %v698 = vunpack.c.0.s8 %v697
          %v699 = vlaneseq
          %v700 = vshrl.u32 %v699, 7
          %v701 = vsub.s32 %v698, %v700
          %v702 = vrot.slane %v695, %v701
          %v703 = vcombine.low %v678, %v686
          %v704 = vcombine.high %v678, %v686
          %v706 = vunpack.c.l.s4 1934713408
          %v707 = vunpack.c.0.s8 %v706
          %v708 = vlaneseq
          %v709 = vshrl.u32 %v708, 7
          %v710 = vsub.s32 %v707, %v709
          %v711 = vrot.slane %v703, %v710
          %v713 = vunpack.c.l.s4 1934713408
          %v714 = vunpack.c.0.s8 %v713
          %v715 = vlaneseq
          %v716 = vshrl.u32 %v715, 7
          %v717 = vsub.s32 %v714, %v716
          %v718 = vrot.slane %v704, %v717
          %v719 = vcombine.low %v694, %v702
          %v720 = vcombine.high %v694, %v702
          %v722 = vunpack.c.l.s4 1934713408
          %v723 = vunpack.c.0.s8 %v722
          %v724 = vlaneseq
          %v725 = vshrl.u32 %v724, 7
          %v726 = vsub.s32 %v723, %v725
          %v727 = vrot.slane %v719, %v726
          %v729 = vunpack.c.l.s4 1934713408
          %v730 = vunpack.c.0.s8 %v729
          %v731 = vlaneseq
          %v732 = vshrl.u32 %v731, 7
          %v733 = vsub.s32 %v730, %v732
          %v734 = vrot.slane %v720, %v733
          %v735 = vcombine.low %v711, %v727
          %v736 = vcombine.high %v711, %v727
          %v737 = vcombine.low %v718, %v734
          %v738 = vcombine.high %v718, %v734
          %v739 = vpack.c.bf16 %v735, %v735
          %v740 = vpack.c.bf16 %v736, %v736
          %v741 = vpack.c.bf16 %v737, %v737
          %v742 = vpack.c.bf16 %v738, %v738
          %743 = vst.msk [vmem:[#allocation3] sm:$0xf] %vm666, %v739
          %744 = vst.msk [vmem:[#allocation3 + $0x4] sm:$0xf] %vm666, %v740
          %745 = vst.msk [vmem:[#allocation3 + $0x8] sm:$0xf] %vm666, %v741
          %746 = vst.msk [vmem:[#allocation3 + $0xc] sm:$0xf] %vm666, %v742
        $region60: #{tpu_custom_call.1} parent=43 // pred_fallthru
          _
        %v747 = vld [vmem:[%s288] sm:$0xff]
        %vm748 = vcmask 261120
        %v749 = vsel %vm748, %v747, 0.0
        %750 = vadd.xlane.f32.xlu0 %v749
        %v751 = vpop.xlane.xlu0 %750
        %v752 = vrcp.pop 32.0
        %v753 = vmul.f32 %v751, %v752
        %v754 = vsub.f32 %v747, %v753
        %v755 = vmul.f32 %v754, %v754
        %v756 = vsel %vm748, %v755, 0.0
        %757 = vadd.xlane.f32.xlu0 %v756
        %v758 = vpop.xlane.xlu0 %757
        %v759 = vmul.f32 %v758, %v752
        %v760 = vadd.f32 %v759, 1e-05
        %v761 = vrsqrt.pop %v760
        %v762 = vmul.f32 %v754, %v761
        %v764 = vlaneseq
        %v765 = vshrl.u32 %v764, 7
        %v766 = vsub.s32 0, %v765
        %v767 = vrot.slane %v336, %v766
        %v769 = vmul.f32 %v762, %v767
        %v771 = vlaneseq
        %v772 = vshrl.u32 %v771, 7
        %v773 = vsub.s32 0, %v772
        %v774 = vrot.slane %v337, %v773
        %v776 = vadd.f32 %v769, %v774
        %v777 = vpack.c.bf16 %v776, %v776
        %v782 = vunpack.c.l.b16 %v338
        %v783 = vunpack.c.l.b16 %v339
        %v784 = vunpack.c.l.b16 %v340
        %v785 = vunpack.c.l.b16 %v341
        %v786 = vpack.c.b16 %v783, %v782
        %v787 = vpack.c.b16 %v785, %v784
        %v791 = vsel %vm748, %v777, 0
        %793 = vmatprep.subr.bf16.mxu0 0
        %794 = vmatpush1.bf16.msra.mxu0 %v786
        %795 = vmatprep.subr.bf16.mxu0 0
        %796 = vmatpush1.bf16.msra.mxu0 %v787
        %797 = vmatprep.subr.bf16.mxu0 0
        %798 = vmatpush1.bf16.msra.mxu0 0
        %799 = vmatprep.subr.bf16.mxu0 0
        %800 = vmatpush1.bf16.msra.mxu0 0
        %801 = vmatprep.subr.bf16.mxu0 0
        %802 = vmatpush1.bf16.msra.mxu0 0
        %803 = vmatprep.subr.bf16.mxu0 0
        %804 = vmatpush1.bf16.msra.mxu0 0
        %805 = vmatprep.subr.bf16.mxu0 0
        %806 = vmatpush1.bf16.msra.mxu0 0
        %807 = vmatprep.subr.bf16.mxu0 0
        %808 = vmatpush1.bf16.msra.mxu0 0
        %809 = vmatprep.subr.bf16.mxu0 0
        %810 = vmatpush1.bf16.msra.mxu0 0
        %811 = vmatprep.subr.bf16.mxu0 0
        %812 = vmatpush1.bf16.msra.mxu0 0
        %813 = vmatprep.subr.bf16.mxu0 0
        %814 = vmatpush1.bf16.msra.mxu0 0
        %815 = vmatprep.subr.bf16.mxu0 0
        %816 = vmatpush1.bf16.msra.mxu0 0
        %817 = vmatprep.subr.bf16.mxu0 0
        %818 = vmatpush1.bf16.msra.mxu0 0
        %819 = vmatprep.subr.bf16.mxu0 0
        %820 = vmatpush1.bf16.msra.mxu0 0
        %821 = vmatprep.subr.bf16.mxu0 0
        %822 = vmatpush1.bf16.msra.mxu0 0
        %823 = vmatprep.subr.bf16.mxu0 0
        %824 = vmatpush1.bf16.msra.mxu0 0
        %825 = vmatprep.mubr.bf16.mxu0 0
        %826 = vmatmul.mubr.bf16.gmra.mrb[0].mxu0 %v791
        %v827 = vpop.f32.mrb[0].mxu0
        %v828 = vadd.f32 0.0, %v827
        %v829 = vpop.f32.mrb[0].mxu0
        %v830 = vpop.f32.mrb[0].mxu0
        %v831 = vpop.f32.mrb[0].mxu0
        %832 = vdwg.mxu0
        %v833 = vmul.f32 %v828, 0.35355338
        %835 = vrot.lane.b32.xlu0 %v833, 120
        %v836 = vpop.permute.xlu0 %835
        %838 = vrot.lane.b32.xlu0 %v833, 112
        %v839 = vpop.permute.xlu0 %838
        %841 = vrot.lane.b32.xlu0 %v833, 104
        %v842 = vpop.permute.xlu0 %841
        %v844 = vcombine.low %v833, %v839
        %v845 = vcombine.high %v833, %v839
        %v847 = vunpack.c.l.s4 1983009808
        %v848 = vunpack.c.0.s8 %v847
        %v849 = vlaneseq
        %v850 = vshrl.u32 %v849, 7
        %v851 = vsub.s32 %v848, %v850
        %v852 = vrot.slane %v844, %v851
        %v854 = vunpack.c.l.s4 1983009808
        %v855 = vunpack.c.0.s8 %v854
        %v856 = vlaneseq
        %v857 = vshrl.u32 %v856, 7
        %v858 = vsub.s32 %v855, %v857
        %v859 = vrot.slane %v845, %v858
        %v860 = vcombine.low %v836, %v842
        %v861 = vcombine.high %v836, %v842
        %v863 = vunpack.c.l.s4 1983009808
        %v864 = vunpack.c.0.s8 %v863
        %v865 = vlaneseq
        %v866 = vshrl.u32 %v865, 7
        %v867 = vsub.s32 %v864, %v866
        %v868 = vrot.slane %v860, %v867
        %v870 = vunpack.c.l.s4 1983009808
        %v871 = vunpack.c.0.s8 %v870
        %v872 = vlaneseq
        %v873 = vshrl.u32 %v872, 7
        %v874 = vsub.s32 %v871, %v873
        %v875 = vrot.slane %v861, %v874
        %v876 = vcombine.low %v852, %v868
        %v877 = vcombine.high %v852, %v868
        %v879 = vunpack.c.l.s4 1934713408
        %v880 = vunpack.c.0.s8 %v879
        %v881 = vlaneseq
        %v882 = vshrl.u32 %v881, 7
        %v883 = vsub.s32 %v880, %v882
        %v884 = vrot.slane %v876, %v883
        %v886 = vunpack.c.l.s4 1934713408
        %v887 = vunpack.c.0.s8 %v886
        %v888 = vlaneseq
        %v889 = vshrl.u32 %v888, 7
        %v890 = vsub.s32 %v887, %v889
        %v891 = vrot.slane %v877, %v890
        %v892 = vcombine.low %v859, %v875
        %v893 = vcombine.high %v859, %v875
        %v895 = vunpack.c.l.s4 1934713408
        %v896 = vunpack.c.0.s8 %v895
        %v897 = vlaneseq
        %v898 = vshrl.u32 %v897, 7
        %v899 = vsub.s32 %v896, %v898
        %v900 = vrot.slane %v892, %v899
        %v902 = vunpack.c.l.s4 1934713408
        %v903 = vunpack.c.0.s8 %v902
        %v904 = vlaneseq
        %v905 = vshrl.u32 %v904, 7
        %v906 = vsub.s32 %v903, %v905
        %v907 = vrot.slane %v893, %v906
        %v908 = vcombine.high %v884, 0.0
        %v909 = vcombine.high %v891, 0.0
        %v910 = vcombine.high %v900, 0.0
        %v911 = vcombine.high %v907, 0.0
        %v912 = vcombine.low %v884, %v891
        %v914 = vunpack.c.l.s4 1983009808
        %v915 = vunpack.c.0.s8 %v914
        %v916 = vlaneseq
        %v917 = vshrl.u32 %v916, 7
        %v918 = vsub.s32 %v915, %v917
        %v919 = vrot.slane %v912, %v918
        %v920 = vcombine.low %v908, %v909
        %v922 = vunpack.c.l.s4 1983009808
        %v923 = vunpack.c.0.s8 %v922
        %v924 = vlaneseq
        %v925 = vshrl.u32 %v924, 7
        %v926 = vsub.s32 %v923, %v925
        %v927 = vrot.slane %v920, %v926
        %v928 = vcombine.low %v900, %v907
        %v930 = vunpack.c.l.s4 1983009808
        %v931 = vunpack.c.0.s8 %v930
        %v932 = vlaneseq
        %v933 = vshrl.u32 %v932, 7
        %v934 = vsub.s32 %v931, %v933
        %v935 = vrot.slane %v928, %v934
        %v936 = vcombine.low %v910, %v911
        %v938 = vunpack.c.l.s4 1983009808
        %v939 = vunpack.c.0.s8 %v938
        %v940 = vlaneseq
        %v941 = vshrl.u32 %v940, 7
        %v942 = vsub.s32 %v939, %v941
        %v943 = vrot.slane %v936, %v942
        %v944 = vcombine.low %v919, %v927
        %v945 = vcombine.high %v919, %v927
        %v947 = vunpack.c.l.s4 1934713408
        %v948 = vunpack.c.0.s8 %v947
        %v949 = vlaneseq
        %v950 = vshrl.u32 %v949, 7
        %v951 = vsub.s32 %v948, %v950
        %v952 = vrot.slane %v944, %v951
        %v954 = vunpack.c.l.s4 1934713408
        %v955 = vunpack.c.0.s8 %v954
        %v956 = vlaneseq
        %v957 = vshrl.u32 %v956, 7
        %v958 = vsub.s32 %v955, %v957
        %v959 = vrot.slane %v945, %v958
        %v960 = vcombine.low %v935, %v943
        %v961 = vcombine.high %v935, %v943
        %v963 = vunpack.c.l.s4 1934713408
        %v964 = vunpack.c.0.s8 %v963
        %v965 = vlaneseq
        %v966 = vshrl.u32 %v965, 7
        %v967 = vsub.s32 %v964, %v966
        %v968 = vrot.slane %v960, %v967
        %v970 = vunpack.c.l.s4 1934713408
        %v971 = vunpack.c.0.s8 %v970
        %v972 = vlaneseq
        %v973 = vshrl.u32 %v972, 7
        %v974 = vsub.s32 %v971, %v973
        %v975 = vrot.slane %v961, %v974
        %v976 = vcombine.low %v952, %v968
        %v977 = vcombine.high %v952, %v968
        %v978 = vcombine.low %v959, %v975
        %v979 = vcombine.high %v959, %v975
        %v980 = vpack.c.bf16 %v976, %v976
        %v981 = vpack.c.bf16 %v977, %v977
        %v982 = vpack.c.bf16 %v978, %v978
        %v983 = vpack.c.bf16 %v979, %v979
        %v984 = vld [vmem:[#allocation2] sm:$0xf]
        %v985 = vld [vmem:[#allocation2 + $0x4] sm:$0xf]
        %v986 = vld [vmem:[#allocation2 + $0x8] sm:$0xf]
        %v987 = vld [vmem:[#allocation2 + $0xc] sm:$0xf]
        %v988 = vld [vmem:[#allocation3] sm:$0xf]
        %v989 = vld [vmem:[#allocation3 + $0x4] sm:$0xf]
        %v990 = vld [vmem:[#allocation3 + $0x8] sm:$0xf]
        %v991 = vld [vmem:[#allocation3 + $0xc] sm:$0xf]
        %vm992 = vcmask 64512
        %v994 = vsel %vm992, %v980, 0
        %v997 = vsel %vm992, %v984, 0
        %999 = vmatprep.subr.bf16.mxu0 0
        %1000 = vmatpush1.bf16.xpose.msra.mxu0 %v997
        %1001 = vmatprep.subr.bf16.mxu0 0
        %1002 = vmatpush1.bf16.xpose.msra.mxu0 0
        %1003 = vmatprep.subr.bf16.mxu0 0
        %1004 = vmatpush1.bf16.xpose.msra.mxu0 0
        %1005 = vmatprep.subr.bf16.mxu0 0
        %1006 = vmatpush1.bf16.xpose.msra.mxu0 0
        %1007 = vmatprep.subr.bf16.mxu0 0
        %1008 = vmatpush1.bf16.xpose.msra.mxu0 0
        %1009 = vmatprep.subr.bf16.mxu0 0
        %1010 = vmatpush1.bf16.xpose.msra.mxu0 0
        %1011 = vmatprep.subr.bf16.mxu0 0
        %1012 = vmatpush1.bf16.xpose.msra.mxu0 0
        %1013 = vmatprep.subr.bf16.mxu0 0
        %1014 = vmatpush1.bf16.xpose.msra.mxu0 0
        %1015 = vmatprep.subr.bf16.mxu0 0
        %1016 = vmatpush1.bf16.xpose.msra.mxu0 0
        %1017 = vmatprep.subr.bf16.mxu0 0
        %1018 = vmatpush1.bf16.xpose.msra.mxu0 0
        %1019 = vmatprep.subr.bf16.mxu0 0
        %1020 = vmatpush1.bf16.xpose.msra.mxu0 0
        %1021 = vmatprep.subr.bf16.mxu0 0
        %1022 = vmatpush1.bf16.xpose.msra.mxu0 0
        %1023 = vmatprep.subr.bf16.mxu0 0
        %1024 = vmatpush1.bf16.xpose.msra.mxu0 0
        %1025 = vmatprep.subr.bf16.mxu0 0
        %1026 = vmatpush1.bf16.xpose.msra.mxu0 0
        %1027 = vmatprep.subr.bf16.mxu0 0
        %1028 = vmatpush1.bf16.xpose.msra.mxu0 0
        %1029 = vmatprep.subr.bf16.mxu0 0
        %1030 = vmatpush1.bf16.xpose.msra.mxu0 0
        %1031 = vmatprep.mubr.bf16.mxu0 0
        %1032 = vmatmul.mubr.bf16.gmra.mrb[0].mxu0 %v994
        %v1033 = vpop.f32.mrb[0].mxu0
        %v1034 = vadd.f32 0.0, %v1033
        %v1035 = vpop.f32.mrb[0].mxu0
        %v1036 = vpop.f32.mrb[0].mxu0
        %v1037 = vpop.f32.mrb[0].mxu0
        %1038 = vdwg.mxu0
        %v1040 = vsel %vm992, %v981, 0
        %v1043 = vsel %vm992, %v985, 0
        %1045 = vmatprep.subr.bf16.mxu0 0
        %1046 = vmatpush1.bf16.xpose.msra.mxu0 %v1043
        %1047 = vmatprep.subr.bf16.mxu0 0
        %1048 = vmatpush1.bf16.xpose.msra.mxu0 0
        %1049 = vmatprep.subr.bf16.mxu0 0
        %1050 = vmatpush1.bf16.xpose.msra.mxu0 0
        %1051 = vmatprep.subr.bf16.mxu0 0
        %1052 = vmatpush1.bf16.xpose.msra.mxu0 0
        %1053 = vmatprep.subr.bf16.mxu0 0
        %1054 = vmatpush1.bf16.xpose.msra.mxu0 0
        %1055 = vmatprep.subr.bf16.mxu0 0
        %1056 = vmatpush1.bf16.xpose.msra.mxu0 0
        %1057 = vmatprep.subr.bf16.mxu0 0
        %1058 = vmatpush1.bf16.xpose.msra.mxu0 0
        %1059 = vmatprep.subr.bf16.mxu0 0
        %1060 = vmatpush1.bf16.xpose.msra.mxu0 0
        %1061 = vmatprep.subr.bf16.mxu0 0
        %1062 = vmatpush1.bf16.xpose.msra.mxu0 0
        %1063 = vmatprep.subr.bf16.mxu0 0
        %1064 = vmatpush1.bf16.xpose.msra.mxu0 0
        %1065 = vmatprep.subr.bf16.mxu0 0
        %1066 = vmatpush1.bf16.xpose.msra.mxu0 0
        %1067 = vmatprep.subr.bf16.mxu0 0
        %1068 = vmatpush1.bf16.xpose.msra.mxu0 0
        %1069 = vmatprep.subr.bf16.mxu0 0
        %1070 = vmatpush1.bf16.xpose.msra.mxu0 0
        %1071 = vmatprep.subr.bf16.mxu0 0
        %1072 = vmatpush1.bf16.xpose.msra.mxu0 0
        %1073 = vmatprep.subr.bf16.mxu0 0
        %1074 = vmatpush1.bf16.xpose.msra.mxu0 0
        %1075 = vmatprep.subr.bf16.mxu0 0
        %1076 = vmatpush1.bf16.xpose.msra.mxu0 0
        %1077 = vmatprep.mubr.bf16.mxu0 0
        %1078 = vmatmul.mubr.bf16.gmra.mrb[0].mxu0 %v1040
        %v1079 = vpop.f32.mrb[0].mxu0
        %v1080 = vadd.f32 0.0, %v1079
        %v1081 = vpop.f32.mrb[0].mxu0
        %v1082 = vpop.f32.mrb[0].mxu0
        %v1083 = vpop.f32.mrb[0].mxu0
        %1084 = vdwg.mxu0
        %v1086 = vsel %vm992, %v982, 0
        %v1089 = vsel %vm992, %v986, 0
        %1091 = vmatprep.subr.bf16.mxu0 0
        %1092 = vmatpush1.bf16.xpose.msra.mxu0 %v1089
        %1093 = vmatprep.subr.bf16.mxu0 0
        %1094 = vmatpush1.bf16.xpose.msra.mxu0 0
        %1095 = vmatprep.subr.bf16.mxu0 0
        %1096 = vmatpush1.bf16.xpose.msra.mxu0 0
        %1097 = vmatprep.subr.bf16.mxu0 0
        %1098 = vmatpush1.bf16.xpose.msra.mxu0 0
        %1099 = vmatprep.subr.bf16.mxu0 0
        %1100 = vmatpush1.bf16.xpose.msra.mxu0 0
        %1101 = vmatprep.subr.bf16.mxu0 0
        %1102 = vmatpush1.bf16.xpose.msra.mxu0 0
        %1103 = vmatprep.subr.bf16.mxu0 0
        %1104 = vmatpush1.bf16.xpose.msra.mxu0 0
        %1105 = vmatprep.subr.bf16.mxu0 0
        %1106 = vmatpush1.bf16.xpose.msra.mxu0 0
        %1107 = vmatprep.subr.bf16.mxu0 0
        %1108 = vmatpush1.bf16.xpose.msra.mxu0 0
        %1109 = vmatprep.subr.bf16.mxu0 0
        %1110 = vmatpush1.bf16.xpose.msra.mxu0 0
        %1111 = vmatprep.subr.bf16.mxu0 0
        %1112 = vmatpush1.bf16.xpose.msra.mxu0 0
        %1113 = vmatprep.subr.bf16.mxu0 0
        %1114 = vmatpush1.bf16.xpose.msra.mxu0 0
        %1115 = vmatprep.subr.bf16.mxu0 0
        %1116 = vmatpush1.bf16.xpose.msra.mxu0 0
        %1117 = vmatprep.subr.bf16.mxu0 0
        %1118 = vmatpush1.bf16.xpose.msra.mxu0 0
        %1119 = vmatprep.subr.bf16.mxu0 0
        %1120 = vmatpush1.bf16.xpose.msra.mxu0 0
        %1121 = vmatprep.subr.bf16.mxu0 0
        %1122 = vmatpush1.bf16.xpose.msra.mxu0 0
        %1123 = vmatprep.mubr.bf16.mxu0 0
        %1124 = vmatmul.mubr.bf16.gmra.mrb[0].mxu0 %v1086
        %v1125 = vpop.f32.mrb[0].mxu0
        %v1126 = vadd.f32 0.0, %v1125
        %v1127 = vpop.f32.mrb[0].mxu0
        %v1128 = vpop.f32.mrb[0].mxu0
        %v1129 = vpop.f32.mrb[0].mxu0
        %1130 = vdwg.mxu0
        %v1132 = vsel %vm992, %v983, 0
        %v1135 = vsel %vm992, %v987, 0
        %1137 = vmatprep.subr.bf16.mxu0 0
        %1138 = vmatpush1.bf16.xpose.msra.mxu0 %v1135
        %1139 = vmatprep.subr.bf16.mxu0 0
        %1140 = vmatpush1.bf16.xpose.msra.mxu0 0
        %1141 = vmatprep.subr.bf16.mxu0 0
        %1142 = vmatpush1.bf16.xpose.msra.mxu0 0
        %1143 = vmatprep.subr.bf16.mxu0 0
        %1144 = vmatpush1.bf16.xpose.msra.mxu0 0
        %1145 = vmatprep.subr.bf16.mxu0 0
        %1146 = vmatpush1.bf16.xpose.msra.mxu0 0
        %1147 = vmatprep.subr.bf16.mxu0 0
        %1148 = vmatpush1.bf16.xpose.msra.mxu0 0
        %1149 = vmatprep.subr.bf16.mxu0 0
        %1150 = vmatpush1.bf16.xpose.msra.mxu0 0
        %1151 = vmatprep.subr.bf16.mxu0 0
        %1152 = vmatpush1.bf16.xpose.msra.mxu0 0
        %1153 = vmatprep.subr.bf16.mxu0 0
        %1154 = vmatpush1.bf16.xpose.msra.mxu0 0
        %1155 = vmatprep.subr.bf16.mxu0 0
        %1156 = vmatpush1.bf16.xpose.msra.mxu0 0
        %1157 = vmatprep.subr.bf16.mxu0 0
        %1158 = vmatpush1.bf16.xpose.msra.mxu0 0
        %1159 = vmatprep.subr.bf16.mxu0 0
        %1160 = vmatpush1.bf16.xpose.msra.mxu0 0
        %1161 = vmatprep.subr.bf16.mxu0 0
        %1162 = vmatpush1.bf16.xpose.msra.mxu0 0
        %1163 = vmatprep.subr.bf16.mxu0 0
        %1164 = vmatpush1.bf16.xpose.msra.mxu0 0
        %1165 = vmatprep.subr.bf16.mxu0 0
        %1166 = vmatpush1.bf16.xpose.msra.mxu0 0
        %1167 = vmatprep.subr.bf16.mxu0 0
        %1168 = vmatpush1.bf16.xpose.msra.mxu0 0
        %1169 = vmatprep.mubr.bf16.mxu0 0
        %1170 = vmatmul.mubr.bf16.gmra.mrb[0].mxu0 %v1132
        %v1171 = vpop.f32.mrb[0].mxu0
        %v1172 = vadd.f32 0.0, %v1171
        %v1173 = vpop.f32.mrb[0].mxu0
        %v1174 = vpop.f32.mrb[0].mxu0
        %v1175 = vpop.f32.mrb[0].mxu0
        %1176 = vdwg.mxu0
        %v1177 = vlaneseq
        %v1178 = vshrl.u32 %v1177, 7
        %s1179 = smul.u32 %s31, 8
        %v1180 = vstv %s1179
        %v1181 = vadd.s32 %v1178, %v1180
        %v1182 = vlaneseq
        %v1183 = vand.u32 %v1182, 127
        %vm1184 = vcmp.ge.s32.totalorder %v1181, %v1183
        %v1185 = vsel %vm1184, %v1034, -1e+30
        %v1186 = vsel %vm1184, %v1080, -1e+30
        %v1187 = vsel %vm1184, %v1126, -1e+30
        %v1188 = vsel %vm1184, %v1172, -1e+30
        %v1189 = vsel %vm992, %v1185, -inf
        %1190 = vmax.xlane.f32.xlu0 %v1189
        %v1191 = vpop.xlane.xlu0 %1190
        %v1192 = vsel %vm992, %v1186, -inf
        %1193 = vmax.xlane.f32.xlu0 %v1192
        %v1194 = vpop.xlane.xlu0 %1193
        %v1195 = vsel %vm992, %v1187, -inf
        %1196 = vmax.xlane.f32.xlu0 %v1195
        %v1197 = vpop.xlane.xlu0 %1196
        %v1198 = vsel %vm992, %v1188, -inf
        %1199 = vmax.xlane.f32.xlu0 %v1198
        %v1200 = vpop.xlane.xlu0 %1199
        %v1201 = vsub.f32 %v1185, %v1191
        %v1202 = vsub.f32 %v1186, %v1194
        %v1203 = vsub.f32 %v1187, %v1197
        %v1204 = vsub.f32 %v1188, %v1200
        %v1205 = vmul.f32 %v1201, 1.442695
        %v1206 = vpow.pop %v1205
        %v1207 = vmul.f32 %v1202, 1.442695
        %v1208 = vpow.pop %v1207
        %v1209 = vmul.f32 %v1203, 1.442695
        %v1210 = vpow.pop %v1209
        %v1211 = vmul.f32 %v1204, 1.442695
        %v1212 = vpow.pop %v1211
        %v1213 = vsel %vm992, %v1206, 0.0
        %1214 = vadd.xlane.f32.xlu0 %v1213
        %v1215 = vpop.xlane.xlu0 %1214
        %v1216 = vsel %vm992, %v1208, 0.0
        %1217 = vadd.xlane.f32.xlu0 %v1216
        %v1218 = vpop.xlane.xlu0 %1217
        %v1219 = vsel %vm992, %v1210, 0.0
        %1220 = vadd.xlane.f32.xlu0 %v1219
        %v1221 = vpop.xlane.xlu0 %1220
        %v1222 = vsel %vm992, %v1212, 0.0
        %1223 = vadd.xlane.f32.xlu0 %v1222
        %v1224 = vpop.xlane.xlu0 %1223
        %v1225 = vpack.c.bf16 %v1206, %v1206
        %v1226 = vpack.c.bf16 %v1208, %v1208
        %v1227 = vpack.c.bf16 %v1210, %v1210
        %v1228 = vpack.c.bf16 %v1212, %v1212
        %v1230 = vsel %vm992, %v1225, 0
        %vm1232 = vcmask 1043456
        %v1234 = vsel %vm1232, %v988, 0
        %1236 = vmatprep.subr.bf16.mxu0 0
        %1237 = vmatpush1.bf16.msra.mxu0 %v1234
        %1238 = vmatprep.subr.bf16.mxu0 0
        %1239 = vmatpush1.bf16.msra.mxu0 0
        %1240 = vmatprep.subr.bf16.mxu0 0
        %1241 = vmatpush1.bf16.msra.mxu0 0
        %1242 = vmatprep.subr.bf16.mxu0 0
        %1243 = vmatpush1.bf16.msra.mxu0 0
        %1244 = vmatprep.subr.bf16.mxu0 0
        %1245 = vmatpush1.bf16.msra.mxu0 0
        %1246 = vmatprep.subr.bf16.mxu0 0
        %1247 = vmatpush1.bf16.msra.mxu0 0
        %1248 = vmatprep.subr.bf16.mxu0 0
        %1249 = vmatpush1.bf16.msra.mxu0 0
        %1250 = vmatprep.subr.bf16.mxu0 0
        %1251 = vmatpush1.bf16.msra.mxu0 0
        %1252 = vmatprep.subr.bf16.mxu0 0
        %1253 = vmatpush1.bf16.msra.mxu0 0
        %1254 = vmatprep.subr.bf16.mxu0 0
        %1255 = vmatpush1.bf16.msra.mxu0 0
        %1256 = vmatprep.subr.bf16.mxu0 0
        %1257 = vmatpush1.bf16.msra.mxu0 0
        %1258 = vmatprep.subr.bf16.mxu0 0
        %1259 = vmatpush1.bf16.msra.mxu0 0
        %1260 = vmatprep.subr.bf16.mxu0 0
        %1261 = vmatpush1.bf16.msra.mxu0 0
        %1262 = vmatprep.subr.bf16.mxu0 0
        %1263 = vmatpush1.bf16.msra.mxu0 0
        %1264 = vmatprep.subr.bf16.mxu0 0
        %1265 = vmatpush1.bf16.msra.mxu0 0
        %1266 = vmatprep.subr.bf16.mxu0 0
        %1267 = vmatpush1.bf16.msra.mxu0 0
        %1268 = vmatprep.mubr.bf16.mxu0 0
        %1269 = vmatmul.mubr.bf16.gmra.mrb[0].mxu0 %v1230
        %v1270 = vpop.f32.mrb[0].mxu0
        %v1271 = vadd.f32 0.0, %v1270
        %v1272 = vpop.f32.mrb[0].mxu0
        %v1273 = vpop.f32.mrb[0].mxu0
        %v1274 = vpop.f32.mrb[0].mxu0
        %1275 = vdwg.mxu0
        %v1277 = vsel %vm992, %v1226, 0
        %v1280 = vsel %vm1232, %v989, 0
        %1282 = vmatprep.subr.bf16.mxu0 0
        %1283 = vmatpush1.bf16.msra.mxu0 %v1280
        %1284 = vmatprep.subr.bf16.mxu0 0
        %1285 = vmatpush1.bf16.msra.mxu0 0
        %1286 = vmatprep.subr.bf16.mxu0 0
        %1287 = vmatpush1.bf16.msra.mxu0 0
        %1288 = vmatprep.subr.bf16.mxu0 0
        %1289 = vmatpush1.bf16.msra.mxu0 0
        %1290 = vmatprep.subr.bf16.mxu0 0
        %1291 = vmatpush1.bf16.msra.mxu0 0
        %1292 = vmatprep.subr.bf16.mxu0 0
        %1293 = vmatpush1.bf16.msra.mxu0 0
        %1294 = vmatprep.subr.bf16.mxu0 0
        %1295 = vmatpush1.bf16.msra.mxu0 0
        %1296 = vmatprep.subr.bf16.mxu0 0
        %1297 = vmatpush1.bf16.msra.mxu0 0
        %1298 = vmatprep.subr.bf16.mxu0 0
        %1299 = vmatpush1.bf16.msra.mxu0 0
        %1300 = vmatprep.subr.bf16.mxu0 0
        %1301 = vmatpush1.bf16.msra.mxu0 0
        %1302 = vmatprep.subr.bf16.mxu0 0
        %1303 = vmatpush1.bf16.msra.mxu0 0
        %1304 = vmatprep.subr.bf16.mxu0 0
        %1305 = vmatpush1.bf16.msra.mxu0 0
        %1306 = vmatprep.subr.bf16.mxu0 0
        %1307 = vmatpush1.bf16.msra.mxu0 0
        %1308 = vmatprep.subr.bf16.mxu0 0
        %1309 = vmatpush1.bf16.msra.mxu0 0
        %1310 = vmatprep.subr.bf16.mxu0 0
        %1311 = vmatpush1.bf16.msra.mxu0 0
        %1312 = vmatprep.subr.bf16.mxu0 0
        %1313 = vmatpush1.bf16.msra.mxu0 0
        %1314 = vmatprep.mubr.bf16.mxu0 0
        %1315 = vmatmul.mubr.bf16.gmra.mrb[0].mxu0 %v1277
        %v1316 = vpop.f32.mrb[0].mxu0
        %v1317 = vadd.f32 0.0, %v1316
        %v1318 = vpop.f32.mrb[0].mxu0
        %v1319 = vpop.f32.mrb[0].mxu0
        %v1320 = vpop.f32.mrb[0].mxu0
        %1321 = vdwg.mxu0
        %v1323 = vsel %vm992, %v1227, 0
        %v1326 = vsel %vm1232, %v990, 0
        %1328 = vmatprep.subr.bf16.mxu0 0
        %1329 = vmatpush1.bf16.msra.mxu0 %v1326
        %1330 = vmatprep.subr.bf16.mxu0 0
        %1331 = vmatpush1.bf16.msra.mxu0 0
        %1332 = vmatprep.subr.bf16.mxu0 0
        %1333 = vmatpush1.bf16.msra.mxu0 0
        %1334 = vmatprep.subr.bf16.mxu0 0
        %1335 = vmatpush1.bf16.msra.mxu0 0
        %1336 = vmatprep.subr.bf16.mxu0 0
        %1337 = vmatpush1.bf16.msra.mxu0 0
        %1338 = vmatprep.subr.bf16.mxu0 0
        %1339 = vmatpush1.bf16.msra.mxu0 0
        %1340 = vmatprep.subr.bf16.mxu0 0
        %1341 = vmatpush1.bf16.msra.mxu0 0
        %1342 = vmatprep.subr.bf16.mxu0 0
        %1343 = vmatpush1.bf16.msra.mxu0 0
        %1344 = vmatprep.subr.bf16.mxu0 0
        %1345 = vmatpush1.bf16.msra.mxu0 0
        %1346 = vmatprep.subr.bf16.mxu0 0
        %1347 = vmatpush1.bf16.msra.mxu0 0
        %1348 = vmatprep.subr.bf16.mxu0 0
        %1349 = vmatpush1.bf16.msra.mxu0 0
        %1350 = vmatprep.subr.bf16.mxu0 0
        %1351 = vmatpush1.bf16.msra.mxu0 0
        %1352 = vmatprep.subr.bf16.mxu0 0
        %1353 = vmatpush1.bf16.msra.mxu0 0
        %1354 = vmatprep.subr.bf16.mxu0 0
        %1355 = vmatpush1.bf16.msra.mxu0 0
        %1356 = vmatprep.subr.bf16.mxu0 0
        %1357 = vmatpush1.bf16.msra.mxu0 0
        %1358 = vmatprep.subr.bf16.mxu0 0
        %1359 = vmatpush1.bf16.msra.mxu0 0
        %1360 = vmatprep.mubr.bf16.mxu0 0
        %1361 = vmatmul.mubr.bf16.gmra.mrb[0].mxu0 %v1323
        %v1362 = vpop.f32.mrb[0].mxu0
        %v1363 = vadd.f32 0.0, %v1362
        %v1364 = vpop.f32.mrb[0].mxu0
        %v1365 = vpop.f32.mrb[0].mxu0
        %v1366 = vpop.f32.mrb[0].mxu0
        %1367 = vdwg.mxu0
        %v1369 = vsel %vm992, %v1228, 0
        %v1372 = vsel %vm1232, %v991, 0
        %1374 = vmatprep.subr.bf16.mxu0 0
        %1375 = vmatpush1.bf16.msra.mxu0 %v1372
        %1376 = vmatprep.subr.bf16.mxu0 0
        %1377 = vmatpush1.bf16.msra.mxu0 0
        %1378 = vmatprep.subr.bf16.mxu0 0
        %1379 = vmatpush1.bf16.msra.mxu0 0
        %1380 = vmatprep.subr.bf16.mxu0 0
        %1381 = vmatpush1.bf16.msra.mxu0 0
        %1382 = vmatprep.subr.bf16.mxu0 0
        %1383 = vmatpush1.bf16.msra.mxu0 0
        %1384 = vmatprep.subr.bf16.mxu0 0
        %1385 = vmatpush1.bf16.msra.mxu0 0
        %1386 = vmatprep.subr.bf16.mxu0 0
        %1387 = vmatpush1.bf16.msra.mxu0 0
        %1388 = vmatprep.subr.bf16.mxu0 0
        %1389 = vmatpush1.bf16.msra.mxu0 0
        %1390 = vmatprep.subr.bf16.mxu0 0
        %1391 = vmatpush1.bf16.msra.mxu0 0
        %1392 = vmatprep.subr.bf16.mxu0 0
        %1393 = vmatpush1.bf16.msra.mxu0 0
        %1394 = vmatprep.subr.bf16.mxu0 0
        %1395 = vmatpush1.bf16.msra.mxu0 0
        %1396 = vmatprep.subr.bf16.mxu0 0
        %1397 = vmatpush1.bf16.msra.mxu0 0
        %1398 = vmatprep.subr.bf16.mxu0 0
        %1399 = vmatpush1.bf16.msra.mxu0 0
        %1400 = vmatprep.subr.bf16.mxu0 0
        %1401 = vmatpush1.bf16.msra.mxu0 0
        %1402 = vmatprep.subr.bf16.mxu0 0
        %1403 = vmatpush1.bf16.msra.mxu0 0
        %1404 = vmatprep.subr.bf16.mxu0 0
        %1405 = vmatpush1.bf16.msra.mxu0 0
        %1406 = vmatprep.mubr.bf16.mxu0 0
        %1407 = vmatmul.mubr.bf16.gmra.mrb[0].mxu0 %v1369
        %v1408 = vpop.f32.mrb[0].mxu0
        %v1409 = vadd.f32 0.0, %v1408
        %v1410 = vpop.f32.mrb[0].mxu0
        %v1411 = vpop.f32.mrb[0].mxu0
        %v1412 = vpop.f32.mrb[0].mxu0
        %1413 = vdwg.mxu0
        %v1414 = vrcp.pop %v1215
        %v1415 = vrcp.pop %v1218
        %v1416 = vrcp.pop %v1221
        %v1417 = vrcp.pop %v1224
        %v1418 = vmul.f32 %v1271, %v1414
        %v1419 = vmul.f32 %v1317, %v1415
        %v1420 = vmul.f32 %v1363, %v1416
        %v1421 = vmul.f32 %v1409, %v1417
        %v1422 = vcombine.low %v1418, %v1420
        %v1423 = vcombine.high %v1418, %v1420
        %v1425 = vunpack.c.l.s4 1983009808
        %v1426 = vunpack.c.0.s8 %v1425
        %v1427 = vlaneseq
        %v1428 = vshrl.u32 %v1427, 7
        %v1429 = vsub.s32 %v1426, %v1428
        %v1430 = vrot.slane %v1422, %v1429
        %v1432 = vunpack.c.l.s4 1983009808
        %v1433 = vunpack.c.0.s8 %v1432
        %v1434 = vlaneseq
        %v1435 = vshrl.u32 %v1434, 7
        %v1436 = vsub.s32 %v1433, %v1435
        %v1437 = vrot.slane %v1423, %v1436
        %v1438 = vcombine.low %v1419, %v1421
        %v1439 = vcombine.high %v1419, %v1421
        %v1441 = vunpack.c.l.s4 1983009808
        %v1442 = vunpack.c.0.s8 %v1441
        %v1443 = vlaneseq
        %v1444 = vshrl.u32 %v1443, 7
        %v1445 = vsub.s32 %v1442, %v1444
        %v1446 = vrot.slane %v1438, %v1445
        %v1448 = vunpack.c.l.s4 1983009808
        %v1449 = vunpack.c.0.s8 %v1448
        %v1450 = vlaneseq
        %v1451 = vshrl.u32 %v1450, 7
        %v1452 = vsub.s32 %v1449, %v1451
        %v1453 = vrot.slane %v1439, %v1452
        %v1454 = vcombine.low %v1430, %v1446
        %v1455 = vcombine.high %v1430, %v1446
        %v1457 = vunpack.c.l.s4 1934713408
        %v1458 = vunpack.c.0.s8 %v1457
        %v1459 = vlaneseq
        %v1460 = vshrl.u32 %v1459, 7
        %v1461 = vsub.s32 %v1458, %v1460
        %v1462 = vrot.slane %v1454, %v1461
        %v1464 = vunpack.c.l.s4 1934713408
        %v1465 = vunpack.c.0.s8 %v1464
        %v1466 = vlaneseq
        %v1467 = vshrl.u32 %v1466, 7
        %v1468 = vsub.s32 %v1465, %v1467
        %v1469 = vrot.slane %v1455, %v1468
        %v1470 = vcombine.low %v1437, %v1453
        %v1471 = vcombine.high %v1437, %v1453
        %v1473 = vunpack.c.l.s4 1934713408
        %v1474 = vunpack.c.0.s8 %v1473
        %v1475 = vlaneseq
        %v1476 = vshrl.u32 %v1475, 7
        %v1477 = vsub.s32 %v1474, %v1476
        %v1478 = vrot.slane %v1470, %v1477
        %v1480 = vunpack.c.l.s4 1934713408
        %v1481 = vunpack.c.0.s8 %v1480
        %v1482 = vlaneseq
        %v1483 = vshrl.u32 %v1482, 7
        %v1484 = vsub.s32 %v1481, %v1483
        %v1485 = vrot.slane %v1471, %v1484
        %v1486 = vcombine.high %v1462, 0.0
        %v1487 = vcombine.high %v1469, 0.0
        %v1488 = vcombine.high %v1478, 0.0
        %v1489 = vcombine.high %v1485, 0.0
        %v1490 = vcombine.low %v1462, %v1469
        %v1492 = vunpack.c.l.s4 1983009808
        %v1493 = vunpack.c.0.s8 %v1492
        %v1494 = vlaneseq
        %v1495 = vshrl.u32 %v1494, 7
        %v1496 = vsub.s32 %v1493, %v1495
        %v1497 = vrot.slane %v1490, %v1496
        %v1498 = vcombine.low %v1486, %v1487
        %v1500 = vunpack.c.l.s4 1983009808
        %v1501 = vunpack.c.0.s8 %v1500
        %v1502 = vlaneseq
        %v1503 = vshrl.u32 %v1502, 7
        %v1504 = vsub.s32 %v1501, %v1503
        %v1505 = vrot.slane %v1498, %v1504
        %v1506 = vcombine.low %v1478, %v1485
        %v1508 = vunpack.c.l.s4 1983009808
        %v1509 = vunpack.c.0.s8 %v1508
        %v1510 = vlaneseq
        %v1511 = vshrl.u32 %v1510, 7
        %v1512 = vsub.s32 %v1509, %v1511
        %v1513 = vrot.slane %v1506, %v1512
        %v1514 = vcombine.low %v1488, %v1489
        %v1516 = vunpack.c.l.s4 1983009808
        %v1517 = vunpack.c.0.s8 %v1516
        %v1518 = vlaneseq
        %v1519 = vshrl.u32 %v1518, 7
        %v1520 = vsub.s32 %v1517, %v1519
        %v1521 = vrot.slane %v1514, %v1520
        %v1522 = vcombine.low %v1497, %v1505
        %v1523 = vcombine.high %v1497, %v1505
        %v1525 = vunpack.c.l.s4 1934713408
        %v1526 = vunpack.c.0.s8 %v1525
        %v1527 = vlaneseq
        %v1528 = vshrl.u32 %v1527, 7
        %v1529 = vsub.s32 %v1526, %v1528
        %v1530 = vrot.slane %v1522, %v1529
        %v1532 = vunpack.c.l.s4 1934713408
        %v1533 = vunpack.c.0.s8 %v1532
        %v1534 = vlaneseq
        %v1535 = vshrl.u32 %v1534, 7
        %v1536 = vsub.s32 %v1533, %v1535
        %v1537 = vrot.slane %v1523, %v1536
        %v1538 = vcombine.low %v1513, %v1521
        %v1539 = vcombine.high %v1513, %v1521
        %v1541 = vunpack.c.l.s4 1934713408
        %v1542 = vunpack.c.0.s8 %v1541
        %v1543 = vlaneseq
        %v1544 = vshrl.u32 %v1543, 7
        %v1545 = vsub.s32 %v1542, %v1544
        %v1546 = vrot.slane %v1538, %v1545
        %v1548 = vunpack.c.l.s4 1934713408
        %v1549 = vunpack.c.0.s8 %v1548
        %v1550 = vlaneseq
        %v1551 = vshrl.u32 %v1550, 7
        %v1552 = vsub.s32 %v1549, %v1551
        %v1553 = vrot.slane %v1539, %v1552
        %v1554 = vcombine.low %v1530, %v1546
        %v1555 = vcombine.high %v1530, %v1546
        %v1556 = vcombine.low %v1537, %v1553
        %v1557 = vcombine.high %v1537, %v1553
        %1559 = vrot.lane.b32.xlu0 %v1555, 8
        %v1560 = vpop.permute.xlu0 %1559
        %1563 = vrot.lane.b32.xlu0 %v1556, 16
        %v1564 = vpop.permute.xlu0 %1563
        %1567 = vrot.lane.b32.xlu0 %v1557, 24
        %v1568 = vpop.permute.xlu0 %1567
        %v1570 = vsel %vm992, %v1554, %v1560
        %vm1571 = vcmask 130048
        %v1572 = vsel %vm1571, %v1570, %v1564
        %vm1573 = vcmask 195584
        %v1574 = vsel %vm1573, %v1572, %v1568
        %v1575 = vpack.c.bf16 %v1574, %v1574
        %v1576 = vld [vmem:[%s5] sm:$0xf]
        %v1577 = vld [vmem:[%s5 + $0x4] sm:$0xf]
        %v1578 = vld [vmem:[%s5 + $0x8] sm:$0xf]
        %v1579 = vld [vmem:[%s5 + $0xc] sm:$0xf]
        %v1584 = vunpack.c.l.b16 %v1576
        %v1585 = vunpack.c.l.b16 %v1577
        %v1586 = vunpack.c.l.b16 %v1578
        %v1587 = vunpack.c.l.b16 %v1579
        %v1588 = vpack.c.b16 %v1585, %v1584
        %v1589 = vpack.c.b16 %v1587, %v1586
        %v1593 = vsel %vm748, %v1575, 0
        %1595 = vmatprep.subr.bf16.mxu0 0
        %1596 = vmatpush1.bf16.msra.mxu0 %v1588
        %1597 = vmatprep.subr.bf16.mxu0 0
        %1598 = vmatpush1.bf16.msra.mxu0 %v1589
        %1599 = vmatprep.subr.bf16.mxu0 0
        %1600 = vmatpush1.bf16.msra.mxu0 0
        %1601 = vmatprep.subr.bf16.mxu0 0
        %1602 = vmatpush1.bf16.msra.mxu0 0
        %1603 = vmatprep.subr.bf16.mxu0 0
        %1604 = vmatpush1.bf16.msra.mxu0 0
        %1605 = vmatprep.subr.bf16.mxu0 0
        %1606 = vmatpush1.bf16.msra.mxu0 0
        %1607 = vmatprep.subr.bf16.mxu0 0
        %1608 = vmatpush1.bf16.msra.mxu0 0
        %1609 = vmatprep.subr.bf16.mxu0 0
        %1610 = vmatpush1.bf16.msra.mxu0 0
        %1611 = vmatprep.subr.bf16.mxu0 0
        %1612 = vmatpush1.bf16.msra.mxu0 0
        %1613 = vmatprep.subr.bf16.mxu0 0
        %1614 = vmatpush1.bf16.msra.mxu0 0
        %1615 = vmatprep.subr.bf16.mxu0 0
        %1616 = vmatpush1.bf16.msra.mxu0 0
        %1617 = vmatprep.subr.bf16.mxu0 0
        %1618 = vmatpush1.bf16.msra.mxu0 0
        %1619 = vmatprep.subr.bf16.mxu0 0
        %1620 = vmatpush1.bf16.msra.mxu0 0
        %1621 = vmatprep.subr.bf16.mxu0 0
        %1622 = vmatpush1.bf16.msra.mxu0 0
        %1623 = vmatprep.subr.bf16.mxu0 0
        %1624 = vmatpush1.bf16.msra.mxu0 0
        %1625 = vmatprep.subr.bf16.mxu0 0
        %1626 = vmatpush1.bf16.msra.mxu0 0
        %1627 = vmatprep.mubr.bf16.mxu0 0
        %1628 = vmatmul.mubr.bf16.gmra.mrb[0].mxu0 %v1593
        %v1629 = vpop.f32.mrb[0].mxu0
        %v1630 = vadd.f32 0.0, %v1629
        %v1631 = vpop.f32.mrb[0].mxu0
        %v1632 = vpop.f32.mrb[0].mxu0
        %v1633 = vpop.f32.mrb[0].mxu0
        %1634 = vdwg.mxu0
        %v1635 = vadd.f32 %v747, %v1630
        %1636 = vst.msk [vmem:[%s334] sm:$0xff] %vm748, %v1635
        %s1637 = sand.u32 %s186, 1
        %s1638 = scalar_lea.sflag [#allocation6], %s1637
        %s1639 = sand.u32 %s186, 1
        %s1640 = smul.addr %s1639, 8
        %s1641 = scalar_lea.vmem [#allocation10], %s1640
        // Predicated region
        $region61: #{tpu_custom_call.1} parent=43 // pred_check
          %p1642 = pneg %p196
        $region62: #{tpu_custom_call.1} parent=43 // pred_check_branch
          %1644 = sbr.rel (%p1642) target = $region64
        $region63: #{tpu_custom_call.1} parent=43 // pred_region
          %s1646 = ssub.s32 128, 128
          %1647 = vsyncadd %s1638, %s1646
          %s1648 = sadd.s32 %s31, %s30
          %s1649 = smul.addr %s1648, 128
          %s1650 = scalar_lea.hbm %s6, %s1649
          %s1652 = sshll.u32 %s1641, 4
          %s1653 = int_to_ptr.vmem [resolvable:$true] %s1652
          %1655 = dma.vmem_to_hbm [thread:$0]  %s1653, 128, %s1650, %s1638
        $region64: #{tpu_custom_call.1} parent=43 // pred_fallthru
          _
      $region44: #{tpu_custom_call.1} parent=5 // pred_fallthru
        _
      %p1656 = scmp.le.s32.totalorder 2, %s21
      // Predicated region
      $region65: #{tpu_custom_call.1} parent=5 // pred_check
        %p1657 = pneg %p1656
      $region66: #{tpu_custom_call.1} parent=5 // pred_check_branch
        %1659 = sbr.rel (%p1657) target = $region68
      $region67: #{tpu_custom_call.1} parent=5 // pred_region
        %s1660 = ssub.s32 %s21, 2
        // Predicated region
        $region69: #{tpu_custom_call.1} parent=67 // pred_check
          %p1661 = pneg %p202
        $region70: #{tpu_custom_call.1} parent=67 // pred_check_branch
          %1663 = sbr.rel (%p1661) target = $region72
        $region71: #{tpu_custom_call.1} parent=67 // pred_region
          %s1664 = sand.u32 %s187, 1
          %s1665 = scalar_lea.sflag [#allocation6], %s1664
          %s1666 = sand.u32 %s187, 1
          %s1667 = smul.addr %s1666, 8
          %s1668 = scalar_lea.vmem [#allocation10], %s1667
          %1669 = dma.done %s1665, 128
        $region72: #{tpu_custom_call.1} parent=67 // pred_fallthru
          _
      $region68: #{tpu_custom_call.1} parent=5 // pred_fallthru
        _
    $region6: #{tpu_custom_call.1} parent=1 // loop_footer
      %s25 = sadd.s32 1, %s21
    $region7: #{tpu_custom_call.1} parent=1 // loop_footer_branch
      %20 = sbr.rel target = $region3
    $region8: #{tpu_custom_call.1} parent=1 // loop_exit
      _
    %1670 = vsyncpa [#allocation5], 1
    %s1671 = scalar_lea.sflag [#allocation5], 1
    %1672 = vsyncpa %s1671, 1
    %1673 = vsyncpa [#allocation8], 1
    %s1674 = scalar_lea.sflag [#allocation8], 1
    %1675 = vsyncpa %s1674, 1
    %1676 = vsyncpa [#allocation6], 1
    %s1677 = scalar_lea.sflag [#allocation6], 1
    %1678 = vsyncpa %s1677, 1

</llo_original>
